<compile_context>
chip_gen: v5e
topology: v5e:2x2
jax: 0.10.0
libtpu: 0.0.40
codegen_flags: <defaults>
</compile_context>

<pallas_src>
import jax
import jax.numpy as jnp
from jax import lax
from jax.experimental import pallas as pl
from jax.experimental.pallas import tpu as pltpu

EPS = 1e-5


def _pick_batch_block(B, T):
    """How many batch elements to pack per grid step.

    Preference: packed lane width (b_blk*T) multiple of 128 (unmasked vst) -> lane width >= 128
    -> at least 2 grid blocks (v7x has 2 TensorCores) -> smallest b_blk.
    """
    divisors = [d for d in range(1, B + 1) if B % d == 0]

    def score(d):
        lanes = d * T
        return (lanes % 128 != 0, lanes < 128, (B // d) < 2, d)

    return min(divisors, key=score)


def resblock_pallas(x, params, groups, *, compute_dtype=jnp.float32):
    """Fused ResBlock forward.  params in PyTorch layout:
       (w1 (C,C,3), b1 (C,), gamma1 (C,), beta1 (C,), w2 (C,C,3), b2, gamma2, beta2)."""
    B, C, T = x.shape
    w1, b1, g1, be1, w2, b2, g2, be2 = params
    gsize = C // groups

    b_blk = _pick_batch_block(B, T)     # batch elements packed per grid step
    nblk = b_blk * T                    # lane width of one block
    nblocks = B // b_blk

    # ---- lane-dense packing: (B, C, T) -> (C, B*T)  (wrapper-side layout plumbing) ----
    # TODO(synk): at production T (>=128) skip this pack/unpack and grid over (B, T-tiles) on the
    # native (B, C, T) layout with a 1-column halo per side; size T_tile for 64 MiB VMEM on v7x
    # and set vmem_limit_bytes in pltpu.CompilerParams.
    xp = jnp.transpose(x, (1, 0, 2)).reshape(C, B * T)

    # ---- conv weights as taps: (C_out, C_in, K=3) -> (3, C_out, C_in); tap k hits x[t+k-1] ----
    w1tap = jnp.transpose(w1, (2, 0, 1)).astype(compute_dtype)
    w2tap = jnp.transpose(w2, (2, 0, 1)).astype(compute_dtype)
    b1c, g1c, be1c = b1[:, None], g1[:, None], be1[:, None]
    b2c, g2c, be2c = b2[:, None], g2[:, None], be2[:, None]

    # ---- block-invariant small matrices / masks (built once, in the wrapper) ----
    gid = jnp.arange(C) // gsize
    mgrp_m = (gid[:, None] == gid[None, :]).astype(jnp.float32) / float(gsize)            # (C, C)
    bidx = jnp.arange(nblk) // T
    savg_m = (bidx[:, None] == jnp.arange(b_blk)[None, :]).astype(jnp.float32) / float(T)  # (N, b_blk)
    eb_m = (jnp.arange(b_blk)[:, None] == bidx[None, :]).astype(jnp.float32)               # (b_blk, N)
    tloc = jnp.arange(nblk) % T
    mask_prev = (tloc != 0).astype(jnp.float32)[None, :]                                   # (1, N)
    mask_next = (tloc != T - 1).astype(jnp.float32)[None, :]                               # (1, N)

    def kernel(x_ref, w1_ref, b1_ref, g1_ref, be1_ref,
               w2_ref, b2_ref, g2_ref, be2_ref,
               savg_ref, mgrp_ref, eb_ref, mprev_ref, mnext_ref, o_ref):
        xb = x_ref[...]                      # (C, N) f32
        sv = savg_ref[...]
        mg = mgrp_ref[...]
        ebv = eb_ref[...]
        mprev = mprev_ref[...]               # (1, N) block-invariant boundary masks
        mnext = mnext_ref[...]

        def conv3(h, w_ref, b_ref):
            # Shifted copies via XLU roll + precomputed boundary masks; three accumulated MXU
            # dots instead of a (3C, N) stacked-activation concat copy.
            hm1 = (pltpu.roll(h, shift=1, axis=1) * mprev).astype(compute_dtype)        # h[t-1]
            hp1 = (pltpu.roll(h, shift=nblk - 1, axis=1) * mnext).astype(compute_dtype)  # h[t+1]
            hc = h.astype(compute_dtype)
            y = jnp.dot(w_ref[0], hm1, preferred_element_type=jnp.float32)
            y = y + jnp.dot(w_ref[1], hc, preferred_element_type=jnp.float32)
            y = y + jnp.dot(w_ref[2], hp1, preferred_element_type=jnp.float32)
            return y + b_ref[...]            # bias (C, 1)

        def gnorm(h, g_ref, be_ref):
            # Per-channel, per-batch moments via dense K=N contractions (always f32).
            # TODO(synk): for production b_blk==1 replace these degenerate-width dots with
            # jnp.sum reductions (XLU) + VPU broadcast so the MXU stays dedicated to the convs.
            mu = jnp.dot(h, sv, preferred_element_type=jnp.float32)         # (C, b_blk)  E[x]
            mu2 = jnp.dot(h * h, sv, preferred_element_type=jnp.float32)    # (C, b_blk)  E[x^2]
            gm = jnp.dot(mg, jnp.concatenate([mu, mu2], axis=1),
                         preferred_element_type=jnp.float32)                # (C, 2*b_blk)
            mean = gm[:, :b_blk]
            var = gm[:, b_blk:] - mean * mean
            inv = lax.rsqrt(var + EPS)
            scale = g_ref[...] * inv                                        # (C, b_blk)
            shift = be_ref[...] - mean * scale
            ssf = jnp.dot(jnp.concatenate([scale, shift], axis=0), ebv,
                          preferred_element_type=jnp.float32)               # (2C, N)
            return h * ssf[:C] + ssf[C:]

        h = jnp.maximum(gnorm(conv3(xb, w1_ref, b1_ref), g1_ref, be1_ref), 0.0)
        h = gnorm(conv3(h, w2_ref, b2_ref), g2_ref, be2_ref)
        o_ref[...] = jnp.maximum(h + xb, 0.0)

    # TODO(synk): single-buffer these block-invariant operands (pipeline_mode=pl.Buffered(1))
    # for VMEM headroom at production C once the target runtime supports it everywhere.
    def full(shape):
        n = len(shape)
        return pl.BlockSpec(shape, lambda i: (0,) * n)

    in_specs = [
        pl.BlockSpec((C, nblk), lambda i: (0, i)),                        # packed activations
        full((3, C, C)), full((C, 1)), full((C, 1)), full((C, 1)),        # conv1 taps, b1, g1, be1
        full((3, C, C)), full((C, 1)), full((C, 1)), full((C, 1)),        # conv2 taps, b2, g2, be2
        full((nblk, b_blk)),                                              # time/batch averaging
        full((C, C)),                                                     # group averaging
        full((b_blk, nblk)),                                              # batch one-hot broadcast
        full((1, nblk)),                                                  # boundary mask h[t-1]
        full((1, nblk)),                                                  # boundary mask h[t+1]
    ]
    out_specs = pl.BlockSpec((C, nblk), lambda i: (0, i))

    # Rough advisory cost so XLA schedules the custom call sensibly.
    ntot = B * T
    flops = int(2 * (2 * C * 3 * C * ntot)                                 # two folded convs
                + 2 * (4 * C * ntot * b_blk + 4 * C * b_blk * ntot)        # stats + broadcast dots
                + 30 * C * ntot)                                           # elementwise
    cost = pl.CostEstimate(flops=flops, transcendentals=int(2 * C * B),
                           bytes_accessed=int(4 * (2 * C * ntot) + nblocks * 4 * (6 * C * C + 8 * C)))

    out_packed = pl.pallas_call(
        kernel,
        out_shape=jax.ShapeDtypeStruct((C, B * T), jnp.float32),
        grid=(nblocks,),
        in_specs=in_specs,
        out_specs=out_specs,
        compiler_params=pltpu.CompilerParams(dimension_semantics=("parallel",)),
        cost_estimate=cost,
    )(xp, w1tap, b1c, g1c, be1c, w2tap, b2c, g2c, be2c,
      savg_m, mgrp_m, eb_m, mask_prev, mask_next)

    # unpack (C, B*T) -> (B, C, T)
    return jnp.transpose(out_packed.reshape(C, B, T), (1, 0, 2))


# ----------------------------- pure-JAX reference -----------------------------
def _conv1d_ref(x, w_oik, b):
    y = lax.conv_general_dilated(x, w_oik, window_strides=(1,), padding=[(1, 1)],
                                 dimension_numbers=('NCH', 'OIH', 'NCH'))
    return y + b[None, :, None]


def _groupnorm_ref(x, gamma, beta, groups):
    B, C, T = x.shape
    xg = x.reshape(B, groups, C // groups, T)
    mean = xg.mean(axis=(2, 3), keepdims=True)
    var = ((xg - mean) ** 2).mean(axis=(2, 3), keepdims=True)
    xn = ((xg - mean) / jnp.sqrt(var + EPS)).reshape(B, C, T)
    return xn * gamma[None, :, None] + beta[None, :, None]


def resblock_ref(x, torch_params, groups):
    w1, b1, g1, be1, w2, b2, g2, be2 = torch_params
    h = _conv1d_ref(x, w1, b1)
    h = _groupnorm_ref(h, g1, be1, groups)
    h = jnp.maximum(h, 0.0)
    h = _conv1d_ref(h, w2, b2)
    h = _groupnorm_ref(h, g2, be2, groups)
    return jnp.maximum(h + x, 0.0)


# --------------------------------- main ---------------------------------------
if __name__ == "__main__":
    B, C, T = 4, 32, 64          # chan=32 -> GroupNorm(4, 32); packs to 2 blocks of 128 lanes
    groups = C // 8

    key = jax.random.PRNGKey(0)
    k = jax.random.split(key, 9)
    x = jax.random.normal(k[0], (B, C, T), jnp.float32)

    # Conv weights in PyTorch layout (C_out, C_in, K=3); deterministic synthetic init.
    scale = 1.0 / jnp.sqrt(3.0 * C)
    w1 = jax.random.normal(k[1], (C, C, 3), jnp.float32) * scale
    b1 = jax.random.normal(k[2], (C,), jnp.float32) * 0.1
    w2 = jax.random.normal(k[3], (C, C, 3), jnp.float32) * scale
    b2 = jax.random.normal(k[4], (C,), jnp.float32) * 0.1
    g1 = 1.0 + 0.1 * jax.random.normal(k[5], (C,), jnp.float32)
    be1 = 0.1 * jax.random.normal(k[6], (C,), jnp.float32)
    g2 = 1.0 + 0.1 * jax.random.normal(k[7], (C,), jnp.float32)
    be2 = 0.1 * jax.random.normal(k[8], (C,), jnp.float32)
    params = (w1, b1, g1, be1, w2, b2, g2, be2)

    ref = resblock_ref(x, params, groups)

    # f32 MXU operands: tight check against the f32 reference.
    out = jax.block_until_ready(resblock_pallas(x, params, groups, compute_dtype=jnp.float32))
    assert jnp.allclose(out, ref, rtol=1e-3, atol=1e-3), \
        f"f32 max abs err {jnp.max(jnp.abs(out - ref))}"

    # bf16 MXU operands (v6e/v7x perf path; GroupNorm stats stay f32): loose check.
    out_bf = jax.block_until_ready(resblock_pallas(x, params, groups, compute_dtype=jnp.bfloat16))
    assert jnp.allclose(out_bf, ref, rtol=1e-1, atol=1e-1), \
        f"bf16 max abs err {jnp.max(jnp.abs(out_bf - ref))}"

    print("KERNEL_OK")
</pallas_src>

<mosaic_0001>
module attributes {stable_mosaic.version = 11 : i64} {
  func.func @kernel(%arg0: i32, %arg1: memref<32x128xf32, #tpu.memory_space<vmem>>, %arg2: memref<3x32x32xf32, #tpu.memory_space<vmem>>, %arg3: memref<32x1xf32, #tpu.memory_space<vmem>>, %arg4: memref<32x1xf32, #tpu.memory_space<vmem>>, %arg5: memref<32x1xf32, #tpu.memory_space<vmem>>, %arg6: memref<3x32x32xf32, #tpu.memory_space<vmem>>, %arg7: memref<32x1xf32, #tpu.memory_space<vmem>>, %arg8: memref<32x1xf32, #tpu.memory_space<vmem>>, %arg9: memref<32x1xf32, #tpu.memory_space<vmem>>, %arg10: memref<128x2xf32, #tpu.memory_space<vmem>>, %arg11: memref<32x32xf32, #tpu.memory_space<vmem>>, %arg12: memref<2x128xf32, #tpu.memory_space<vmem>>, %arg13: memref<1x128xf32, #tpu.memory_space<vmem>>, %arg14: memref<1x128xf32, #tpu.memory_space<vmem>>, %arg15: memref<32x128xf32, #tpu.memory_space<vmem>>) attributes {dimension_semantics = [#tpu.dimension_semantics<parallel>], iteration_bounds = array<i64: 2>, scalar_prefetch = 0 : i64, scratch_operands = 0 : i64, tpu.core_type = #tpu.core_type<tc>, window_params = [{transform_indices = @transform_0, window_bounds = array<i64: 32, 128>}, {pipeline_mode = #tpu.pipeline_mode<synchronous>, transform_indices = @transform_1, window_bounds = array<i64: 3, 32, 32>}, {pipeline_mode = #tpu.pipeline_mode<synchronous>, transform_indices = @transform_2, window_bounds = array<i64: 32, 1>}, {pipeline_mode = #tpu.pipeline_mode<synchronous>, transform_indices = @transform_3, window_bounds = array<i64: 32, 1>}, {pipeline_mode = #tpu.pipeline_mode<synchronous>, transform_indices = @transform_4, window_bounds = array<i64: 32, 1>}, {pipeline_mode = #tpu.pipeline_mode<synchronous>, transform_indices = @transform_5, window_bounds = array<i64: 3, 32, 32>}, {pipeline_mode = #tpu.pipeline_mode<synchronous>, transform_indices = @transform_6, window_bounds = array<i64: 32, 1>}, {pipeline_mode = #tpu.pipeline_mode<synchronous>, transform_indices = @transform_7, window_bounds = array<i64: 32, 1>}, {pipeline_mode = #tpu.pipeline_mode<synchronous>, transform_indices = @transform_8, window_bounds = array<i64: 32, 1>}, {pipeline_mode = #tpu.pipeline_mode<synchronous>, transform_indices = @transform_9, window_bounds = array<i64: 128, 2>}, {pipeline_mode = #tpu.pipeline_mode<synchronous>, transform_indices = @transform_10, window_bounds = array<i64: 32, 32>}, {pipeline_mode = #tpu.pipeline_mode<synchronous>, transform_indices = @transform_11, window_bounds = array<i64: 2, 128>}, {pipeline_mode = #tpu.pipeline_mode<synchronous>, transform_indices = @transform_12, window_bounds = array<i64: 1, 128>}, {pipeline_mode = #tpu.pipeline_mode<synchronous>, transform_indices = @transform_13, window_bounds = array<i64: 1, 128>}, {transform_indices = @transform_14, window_bounds = array<i64: 32, 128>}]} {
    %c0 = arith.constant 0 : index
    %c0_0 = arith.constant 0 : index
    %0 = vector.load %arg1[%c0, %c0_0] : memref<32x128xf32, #tpu.memory_space<vmem>>, vector<32x128xf32>
    %c0_1 = arith.constant 0 : index
    %c0_2 = arith.constant 0 : index
    %1 = vector.load %arg10[%c0_1, %c0_2] : memref<128x2xf32, #tpu.memory_space<vmem>>, vector<128x2xf32>
    %c0_3 = arith.constant 0 : index
    %c0_4 = arith.constant 0 : index
    %2 = vector.load %arg11[%c0_3, %c0_4] : memref<32x32xf32, #tpu.memory_space<vmem>>, vector<32x32xf32>
    %c0_5 = arith.constant 0 : index
    %c0_6 = arith.constant 0 : index
    %3 = vector.load %arg12[%c0_5, %c0_6] : memref<2x128xf32, #tpu.memory_space<vmem>>, vector<2x128xf32>
    %c0_7 = arith.constant 0 : index
    %c0_8 = arith.constant 0 : index
    %4 = vector.load %arg13[%c0_7, %c0_8] : memref<1x128xf32, #tpu.memory_space<vmem>>, vector<1x128xf32>
    %c0_9 = arith.constant 0 : index
    %c0_10 = arith.constant 0 : index
    %5 = vector.load %arg14[%c0_9, %c0_10] : memref<1x128xf32, #tpu.memory_space<vmem>>, vector<1x128xf32>
    %c1_i32 = arith.constant 1 : i32
    %6 = tpu.dynamic_rotate %0 by %c1_i32 dim 1 : vector<32x128xf32>, i32 -> vector<32x128xf32>
    %7 = vector.broadcast %4 : vector<1x128xf32> to vector<32x128xf32>
    %8 = arith.mulf %6, %7 : vector<32x128xf32>
    %c127_i32 = arith.constant 127 : i32
    %9 = tpu.dynamic_rotate %0 by %c127_i32 dim 1 : vector<32x128xf32>, i32 -> vector<32x128xf32>
    %10 = vector.broadcast %5 : vector<1x128xf32> to vector<32x128xf32>
    %11 = arith.mulf %9, %10 : vector<32x128xf32>
    %c0_11 = arith.constant 0 : index
    %c0_12 = arith.constant 0 : index
    %c0_13 = arith.constant 0 : index
    %12 = vector.load %arg2[%c0_11, %c0_12, %c0_13] : memref<3x32x32xf32, #tpu.memory_space<vmem>>, vector<1x32x32xf32>
    %13 = vector.shape_cast %12 : vector<1x32x32xf32> to vector<32x32xf32>
    %cst = arith.constant dense<0.000000e+00> : vector<32x128xf32>
    %14 = tpu.matmul %13, %8, %cst {dimension_numbers = #tpu.dot_dimension_numbers<[1], [0], [0], [1], [0, 0, 1, 1], [], []>} : vector<32x32xf32>, vector<32x128xf32>, vector<32x128xf32> -> vector<32x128xf32>
    %c1 = arith.constant 1 : index
    %c0_14 = arith.constant 0 : index
    %c0_15 = arith.constant 0 : index
    %15 = vector.load %arg2[%c1, %c0_14, %c0_15] : memref<3x32x32xf32, #tpu.memory_space<vmem>>, vector<1x32x32xf32>
    %16 = vector.shape_cast %15 : vector<1x32x32xf32> to vector<32x32xf32>
    %cst_16 = arith.constant dense<0.000000e+00> : vector<32x128xf32>
    %17 = tpu.matmul %16, %0, %cst_16 {dimension_numbers = #tpu.dot_dimension_numbers<[1], [0], [0], [1], [0, 0, 1, 1], [], []>} : vector<32x32xf32>, vector<32x128xf32>, vector<32x128xf32> -> vector<32x128xf32>
    %18 = arith.addf %14, %17 : vector<32x128xf32>
    %c2 = arith.constant 2 : index
    %c0_17 = arith.constant 0 : index
    %c0_18 = arith.constant 0 : index
    %19 = vector.load %arg2[%c2, %c0_17, %c0_18] : memref<3x32x32xf32, #tpu.memory_space<vmem>>, vector<1x32x32xf32>
    %20 = vector.shape_cast %19 : vector<1x32x32xf32> to vector<32x32xf32>
    %cst_19 = arith.constant dense<0.000000e+00> : vector<32x128xf32>
    %21 = tpu.matmul %20, %11, %cst_19 {dimension_numbers = #tpu.dot_dimension_numbers<[1], [0], [0], [1], [0, 0, 1, 1], [], []>} : vector<32x32xf32>, vector<32x128xf32>, vector<32x128xf32> -> vector<32x128xf32>
    %22 = arith.addf %18, %21 : vector<32x128xf32>
    %c0_20 = arith.constant 0 : index
    %c0_21 = arith.constant 0 : index
    %23 = vector.load %arg3[%c0_20, %c0_21] : memref<32x1xf32, #tpu.memory_space<vmem>>, vector<32x1xf32>
    %24 = vector.broadcast %23 : vector<32x1xf32> to vector<32x128xf32>
    %25 = arith.addf %22, %24 : vector<32x128xf32>
    %cst_22 = arith.constant dense<0.000000e+00> : vector<32x2xf32>
    %26 = tpu.matmul %25, %1, %cst_22 {dimension_numbers = #tpu.dot_dimension_numbers<[1], [0], [0], [1], [0, 0, 1, 1], [], []>} : vector<32x128xf32>, vector<128x2xf32>, vector<32x2xf32> -> vector<32x2xf32>
    %27 = arith.mulf %25, %25 : vector<32x128xf32>
    %cst_23 = arith.constant dense<0.000000e+00> : vector<32x2xf32>
    %28 = tpu.matmul %27, %1, %cst_23 {dimension_numbers = #tpu.dot_dimension_numbers<[1], [0], [0], [1], [0, 0, 1, 1], [], []>} : vector<32x128xf32>, vector<128x2xf32>, vector<32x2xf32> -> vector<32x2xf32>
    %29 = tpu.concatenate %26, %28 in 1 : vector<32x2xf32>, vector<32x2xf32> -> vector<32x4xf32>
    %cst_24 = arith.constant dense<0.000000e+00> : vector<32x4xf32>
    %30 = tpu.matmul %2, %29, %cst_24 {dimension_numbers = #tpu.dot_dimension_numbers<[1], [0], [0], [1], [0, 0, 1, 1], [], []>} : vector<32x32xf32>, vector<32x4xf32>, vector<32x4xf32> -> vector<32x4xf32>
    %31 = vector.extract_strided_slice %30 {offsets = [0, 0], sizes = [32, 2], strides = [1, 1]} : vector<32x4xf32> to vector<32x2xf32>
    %32 = vector.extract_strided_slice %30 {offsets = [0, 2], sizes = [32, 2], strides = [1, 1]} : vector<32x4xf32> to vector<32x2xf32>
    %33 = arith.mulf %31, %31 : vector<32x2xf32>
    %34 = arith.subf %32, %33 : vector<32x2xf32>
    %cst_25 = arith.constant 9.99999974E-6 : f32
    %35 = vector.broadcast %cst_25 : f32 to vector<32x2xf32>
    %36 = arith.addf %34, %35 : vector<32x2xf32>
    %37 = math.rsqrt %36 : vector<32x2xf32>
    %c0_26 = arith.constant 0 : index
    %c0_27 = arith.constant 0 : index
    %38 = vector.load %arg4[%c0_26, %c0_27] : memref<32x1xf32, #tpu.memory_space<vmem>>, vector<32x1xf32>
    %39 = vector.broadcast %38 : vector<32x1xf32> to vector<32x2xf32>
    %40 = arith.mulf %39, %37 : vector<32x2xf32>
    %c0_28 = arith.constant 0 : index
    %c0_29 = arith.constant 0 : index
    %41 = vector.load %arg5[%c0_28, %c0_29] : memref<32x1xf32, #tpu.memory_space<vmem>>, vector<32x1xf32>
    %42 = arith.mulf %31, %40 : vector<32x2xf32>
    %43 = vector.broadcast %41 : vector<32x1xf32> to vector<32x2xf32>
    %44 = arith.subf %43, %42 : vector<32x2xf32>
    %45 = tpu.concatenate %40, %44 in 0 : vector<32x2xf32>, vector<32x2xf32> -> vector<64x2xf32>
    %cst_30 = arith.constant dense<0.000000e+00> : vector<64x128xf32>
    %46 = tpu.matmul %45, %3, %cst_30 {dimension_numbers = #tpu.dot_dimension_numbers<[1], [0], [0], [1], [0, 0, 1, 1], [], []>} : vector<64x2xf32>, vector<2x128xf32>, vector<64x128xf32> -> vector<64x128xf32>
    %47 = vector.extract_strided_slice %46 {offsets = [0, 0], sizes = [32, 128], strides = [1, 1]} : vector<64x128xf32> to vector<32x128xf32>
    %48 = arith.mulf %25, %47 : vector<32x128xf32>
    %49 = vector.extract_strided_slice %46 {offsets = [32, 0], sizes = [32, 128], strides = [1, 1]} : vector<64x128xf32> to vector<32x128xf32>
    %50 = arith.addf %48, %49 : vector<32x128xf32>
    %cst_31 = arith.constant 0.000000e+00 : f32
    %51 = vector.broadcast %cst_31 : f32 to vector<32x128xf32>
    %52 = arith.maximumf %50, %51 : vector<32x128xf32>
    %c1_i32_32 = arith.constant 1 : i32
    %53 = tpu.dynamic_rotate %52 by %c1_i32_32 dim 1 : vector<32x128xf32>, i32 -> vector<32x128xf32>
    %54 = vector.broadcast %4 : vector<1x128xf32> to vector<32x128xf32>
    %55 = arith.mulf %53, %54 : vector<32x128xf32>
    %c127_i32_33 = arith.constant 127 : i32
    %56 = tpu.dynamic_rotate %52 by %c127_i32_33 dim 1 : vector<32x128xf32>, i32 -> vector<32x128xf32>
    %57 = vector.broadcast %5 : vector<1x128xf32> to vector<32x128xf32>
    %58 = arith.mulf %56, %57 : vector<32x128xf32>
    %c0_34 = arith.constant 0 : index
    %c0_35 = arith.constant 0 : index
    %c0_36 = arith.constant 0 : index
    %59 = vector.load %arg6[%c0_34, %c0_35, %c0_36] : memref<3x32x32xf32, #tpu.memory_space<vmem>>, vector<1x32x32xf32>
    %60 = vector.shape_cast %59 : vector<1x32x32xf32> to vector<32x32xf32>
    %cst_37 = arith.constant dense<0.000000e+00> : vector<32x128xf32>
    %61 = tpu.matmul %60, %55, %cst_37 {dimension_numbers = #tpu.dot_dimension_numbers<[1], [0], [0], [1], [0, 0, 1, 1], [], []>} : vector<32x32xf32>, vector<32x128xf32>, vector<32x128xf32> -> vector<32x128xf32>
    %c1_38 = arith.constant 1 : index
    %c0_39 = arith.constant 0 : index
    %c0_40 = arith.constant 0 : index
    %62 = vector.load %arg6[%c1_38, %c0_39, %c0_40] : memref<3x32x32xf32, #tpu.memory_space<vmem>>, vector<1x32x32xf32>
    %63 = vector.shape_cast %62 : vector<1x32x32xf32> to vector<32x32xf32>
    %cst_41 = arith.constant dense<0.000000e+00> : vector<32x128xf32>
    %64 = tpu.matmul %63, %52, %cst_41 {dimension_numbers = #tpu.dot_dimension_numbers<[1], [0], [0], [1], [0, 0, 1, 1], [], []>} : vector<32x32xf32>, vector<32x128xf32>, vector<32x128xf32> -> vector<32x128xf32>
    %65 = arith.addf %61, %64 : vector<32x128xf32>
    %c2_42 = arith.constant 2 : index
    %c0_43 = arith.constant 0 : index
    %c0_44 = arith.constant 0 : index
    %66 = vector.load %arg6[%c2_42, %c0_43, %c0_44] : memref<3x32x32xf32, #tpu.memory_space<vmem>>, vector<1x32x32xf32>
    %67 = vector.shape_cast %66 : vector<1x32x32xf32> to vector<32x32xf32>
    %cst_45 = arith.constant dense<0.000000e+00> : vector<32x128xf32>
    %68 = tpu.matmul %67, %58, %cst_45 {dimension_numbers = #tpu.dot_dimension_numbers<[1], [0], [0], [1], [0, 0, 1, 1], [], []>} : vector<32x32xf32>, vector<32x128xf32>, vector<32x128xf32> -> vector<32x128xf32>
    %69 = arith.addf %65, %68 : vector<32x128xf32>
    %c0_46 = arith.constant 0 : index
    %c0_47 = arith.constant 0 : index
    %70 = vector.load %arg7[%c0_46, %c0_47] : memref<32x1xf32, #tpu.memory_space<vmem>>, vector<32x1xf32>
    %71 = vector.broadcast %70 : vector<32x1xf32> to vector<32x128xf32>
    %72 = arith.addf %69, %71 : vector<32x128xf32>
    %cst_48 = arith.constant dense<0.000000e+00> : vector<32x2xf32>
    %73 = tpu.matmul %72, %1, %cst_48 {dimension_numbers = #tpu.dot_dimension_numbers<[1], [0], [0], [1], [0, 0, 1, 1], [], []>} : vector<32x128xf32>, vector<128x2xf32>, vector<32x2xf32> -> vector<32x2xf32>
    %74 = arith.mulf %72, %72 : vector<32x128xf32>
    %cst_49 = arith.constant dense<0.000000e+00> : vector<32x2xf32>
    %75 = tpu.matmul %74, %1, %cst_49 {dimension_numbers = #tpu.dot_dimension_numbers<[1], [0], [0], [1], [0, 0, 1, 1], [], []>} : vector<32x128xf32>, vector<128x2xf32>, vector<32x2xf32> -> vector<32x2xf32>
    %76 = tpu.concatenate %73, %75 in 1 : vector<32x2xf32>, vector<32x2xf32> -> vector<32x4xf32>
    %cst_50 = arith.constant dense<0.000000e+00> : vector<32x4xf32>
    %77 = tpu.matmul %2, %76, %cst_50 {dimension_numbers = #tpu.dot_dimension_numbers<[1], [0], [0], [1], [0, 0, 1, 1], [], []>} : vector<32x32xf32>, vector<32x4xf32>, vector<32x4xf32> -> vector<32x4xf32>
    %78 = vector.extract_strided_slice %77 {offsets = [0, 0], sizes = [32, 2], strides = [1, 1]} : vector<32x4xf32> to vector<32x2xf32>
    %79 = vector.extract_strided_slice %77 {offsets = [0, 2], sizes = [32, 2], strides = [1, 1]} : vector<32x4xf32> to vector<32x2xf32>
    %80 = arith.mulf %78, %78 : vector<32x2xf32>
    %81 = arith.subf %79, %80 : vector<32x2xf32>
    %cst_51 = arith.constant 9.99999974E-6 : f32
    %82 = vector.broadcast %cst_51 : f32 to vector<32x2xf32>
    %83 = arith.addf %81, %82 : vector<32x2xf32>
    %84 = math.rsqrt %83 : vector<32x2xf32>
    %c0_52 = arith.constant 0 : index
    %c0_53 = arith.constant 0 : index
    %85 = vector.load %arg8[%c0_52, %c0_53] : memref<32x1xf32, #tpu.memory_space<vmem>>, vector<32x1xf32>
    %86 = vector.broadcast %85 : vector<32x1xf32> to vector<32x2xf32>
    %87 = arith.mulf %86, %84 : vector<32x2xf32>
    %c0_54 = arith.constant 0 : index
    %c0_55 = arith.constant 0 : index
    %88 = vector.load %arg9[%c0_54, %c0_55] : memref<32x1xf32, #tpu.memory_space<vmem>>, vector<32x1xf32>
    %89 = arith.mulf %78, %87 : vector<32x2xf32>
    %90 = vector.broadcast %88 : vector<32x1xf32> to vector<32x2xf32>
    %91 = arith.subf %90, %89 : vector<32x2xf32>
    %92 = tpu.concatenate %87, %91 in 0 : vector<32x2xf32>, vector<32x2xf32> -> vector<64x2xf32>
    %cst_56 = arith.constant dense<0.000000e+00> : vector<64x128xf32>
    %93 = tpu.matmul %92, %3, %cst_56 {dimension_numbers = #tpu.dot_dimension_numbers<[1], [0], [0], [1], [0, 0, 1, 1], [], []>} : vector<64x2xf32>, vector<2x128xf32>, vector<64x128xf32> -> vector<64x128xf32>
    %94 = vector.extract_strided_slice %93 {offsets = [0, 0], sizes = [32, 128], strides = [1, 1]} : vector<64x128xf32> to vector<32x128xf32>
    %95 = arith.mulf %72, %94 : vector<32x128xf32>
    %96 = vector.extract_strided_slice %93 {offsets = [32, 0], sizes = [32, 128], strides = [1, 1]} : vector<64x128xf32> to vector<32x128xf32>
    %97 = arith.addf %95, %96 : vector<32x128xf32>
    %98 = arith.addf %97, %0 : vector<32x128xf32>
    %cst_57 = arith.constant 0.000000e+00 : f32
    %99 = vector.broadcast %cst_57 : f32 to vector<32x128xf32>
    %100 = arith.maximumf %98, %99 : vector<32x128xf32>
    %c0_58 = arith.constant 0 : index
    %c0_59 = arith.constant 0 : index
    %101 = vector.load %arg15[%c0_58, %c0_59] : memref<32x128xf32, #tpu.memory_space<vmem>>, vector<32x128xf32>
    tpu.vector_store %arg15[%c0_58, %c0_59], %100 {strides = array<i32>} : memref<32x128xf32, #tpu.memory_space<vmem>>, vector<32x128xf32>,
    return
  }
  func.func @transform_0(%arg0: i32) -> (i32, i32) {
    %c0_i32 = arith.constant 0 : i32
    %c0_i32_0 = arith.constant 0 : i32
    return %c0_i32, %arg0 : i32, i32
  }
  func.func @transform_1(%arg0: i32) -> (i32, i32, i32) {
    %c0_i32 = arith.constant 0 : i32
    %c0_i32_0 = arith.constant 0 : i32
    %c0_i32_1 = arith.constant 0 : i32
    %c0_i32_2 = arith.constant 0 : i32
    return %c0_i32, %c0_i32_0, %c0_i32_1 : i32, i32, i32
  }
  func.func @transform_2(%arg0: i32) -> (i32, i32) {
    %c0_i32 = arith.constant 0 : i32
    %c0_i32_0 = arith.constant 0 : i32
    %c0_i32_1 = arith.constant 0 : i32
    return %c0_i32, %c0_i32_0 : i32, i32
  }
  func.func @transform_3(%arg0: i32) -> (i32, i32) {
    %c0_i32 = arith.constant 0 : i32
    %c0_i32_0 = arith.constant 0 : i32
    %c0_i32_1 = arith.constant 0 : i32
    return %c0_i32, %c0_i32_0 : i32, i32
  }
  func.func @transform_4(%arg0: i32) -> (i32, i32) {
    %c0_i32 = arith.constant 0 : i32
    %c0_i32_0 = arith.constant 0 : i32
    %c0_i32_1 = arith.constant 0 : i32
    return %c0_i32, %c0_i32_0 : i32, i32
  }
  func.func @transform_5(%arg0: i32) -> (i32, i32, i32) {
    %c0_i32 = arith.constant 0 : i32
    %c0_i32_0 = arith.constant 0 : i32
    %c0_i32_1 = arith.constant 0 : i32
    %c0_i32_2 = arith.constant 0 : i32
    return %c0_i32, %c0_i32_0, %c0_i32_1 : i32, i32, i32
  }
  func.func @transform_6(%arg0: i32) -> (i32, i32) {
    %c0_i32 = arith.constant 0 : i32
    %c0_i32_0 = arith.constant 0 : i32
    %c0_i32_1 = arith.constant 0 : i32
    return %c0_i32, %c0_i32_0 : i32, i32
  }
  func.func @transform_7(%arg0: i32) -> (i32, i32) {
    %c0_i32 = arith.constant 0 : i32
    %c0_i32_0 = arith.constant 0 : i32
    %c0_i32_1 = arith.constant 0 : i32
    return %c0_i32, %c0_i32_0 : i32, i32
  }
  func.func @transform_8(%arg0: i32) -> (i32, i32) {
    %c0_i32 = arith.constant 0 : i32
    %c0_i32_0 = arith.constant 0 : i32
    %c0_i32_1 = arith.constant 0 : i32
    return %c0_i32, %c0_i32_0 : i32, i32
  }
  func.func @transform_9(%arg0: i32) -> (i32, i32) {
    %c0_i32 = arith.constant 0 : i32
    %c0_i32_0 = arith.constant 0 : i32
    %c0_i32_1 = arith.constant 0 : i32
    return %c0_i32, %c0_i32_0 : i32, i32
  }
  func.func @transform_10(%arg0: i32) -> (i32, i32) {
    %c0_i32 = arith.constant 0 : i32
    %c0_i32_0 = arith.constant 0 : i32
    %c0_i32_1 = arith.constant 0 : i32
    return %c0_i32, %c0_i32_0 : i32, i32
  }
  func.func @transform_11(%arg0: i32) -> (i32, i32) {
    %c0_i32 = arith.constant 0 : i32
    %c0_i32_0 = arith.constant 0 : i32
    %c0_i32_1 = arith.constant 0 : i32
    return %c0_i32, %c0_i32_0 : i32, i32
  }
  func.func @transform_12(%arg0: i32) -> (i32, i32) {
    %c0_i32 = arith.constant 0 : i32
    %c0_i32_0 = arith.constant 0 : i32
    %c0_i32_1 = arith.constant 0 : i32
    return %c0_i32, %c0_i32_0 : i32, i32
  }
  func.func @transform_13(%arg0: i32) -> (i32, i32) {
    %c0_i32 = arith.constant 0 : i32
    %c0_i32_0 = arith.constant 0 : i32
    %c0_i32_1 = arith.constant 0 : i32
    return %c0_i32, %c0_i32_0 : i32, i32
  }
  func.func @transform_14(%arg0: i32) -> (i32, i32) {
    %c0_i32 = arith.constant 0 : i32
    %c0_i32_0 = arith.constant 0 : i32
    return %c0_i32, %arg0 : i32, i32
  }
}

</mosaic_0001>

<llo_original>
// kernel: tpu_custom_call.1
$region0: #{tpu_custom_call.1}
  #allocation0 [shape = 'u32[]', space=smem, size = 0x4, offset = 0x4, fixed_abs, tag = 'smem constant byte address 0x4 - core index']
  #allocation1 [shape = 'u32[72,128]{1,0:T(1,128)}', space=vmem, size = 0x9000, scoped, tag = 'internal scratch']
  %s0 = inlined_call_operand.vmem [shape: f32[32,256], index: 0, kind: input, shape index: {}]
  %s1 = inlined_call_operand.vmem [shape: f32[3,32,32], index: 1, kind: input, shape index: {}]
  %s2 = inlined_call_operand.vmem [shape: f32[32,1], index: 2, kind: input, shape index: {}]
  %s3 = inlined_call_operand.vmem [shape: f32[32,1], index: 3, kind: input, shape index: {}]
  %s4 = inlined_call_operand.vmem [shape: f32[32,1], index: 4, kind: input, shape index: {}]
  %s5 = inlined_call_operand.vmem [shape: f32[3,32,32], index: 5, kind: input, shape index: {}]
  %s6 = inlined_call_operand.vmem [shape: f32[32,1], index: 6, kind: input, shape index: {}]
  %s7 = inlined_call_operand.vmem [shape: f32[32,1], index: 7, kind: input, shape index: {}]
  %s8 = inlined_call_operand.vmem [shape: f32[32,1], index: 8, kind: input, shape index: {}]
  %s9 = inlined_call_operand.vmem [shape: f32[128,2], index: 9, kind: input, shape index: {}]
  %s10 = inlined_call_operand.vmem [shape: f32[32,32], index: 10, kind: input, shape index: {}]
  %s11 = inlined_call_operand.vmem [shape: f32[2,128], index: 11, kind: input, shape index: {}]
  %s12 = inlined_call_operand.vmem [shape: f32[1,128], index: 12, kind: input, shape index: {}]
  %s13 = inlined_call_operand.vmem [shape: f32[1,128], index: 13, kind: input, shape index: {}]
  %s14 = inlined_call_operand.hbm [shape: f32[32,256], index: 14, kind: output, shape index: {}]
  %s15 = sld [smem:[#allocation0]]
  $region127: #{tpu_custom_call.1} parent=0
    _
  %s17 = ssub.s32 1, %s15
  %s18 = scalar_select 0, %s17, %s15
  $region1: #{tpu_custom_call.1} parent=0
    #allocation2 [shape = 'u8[32768]{0}', space=vmem, size = 0x8000, scoped, tag = 'input window, operand 0']
    #allocation3 [shape = 'u8[32768]{0}', space=vmem, size = 0x8000, scoped, tag = 'output window, operand 0']
    #allocation4 [shape = 's32[2]{0}', space=sflag, size = 0x8, scoped, tag = 'scoped memory for tpu_custom_call.1']
    %19 = vsyncpa [#allocation4], 0
    %s20 = scalar_lea.sflag [#allocation4], 1
    %21 = vsyncpa %s20, 0
    loop: start=0, step=1, limit=4
    $region2: #{tpu_custom_call.1} parent=1 // loop_pre_header
      _
    $region3: #{tpu_custom_call.1} parent=1 // loop_header
      %s23 = sphi 0, %s27
      %p24 = scmp.ge.s32.totalorder %s23, 4
      %s33 = sphi 0, %s35
      %s36 = sphi 0, %s33
      %s37 = sphi 0, %s36
      %s53 = sphi 0, %s37
      %s57 = sphi 0, %s57
      %s59 = sphi 0, %s57
      %s60 = sphi 0, %s59
      %s74 = sphi 0, %s60
      %s78 = sphi 0, %s78
      %s80 = sphi 0, %s78
      %s81 = sphi 0, %s80
      %s95 = sphi 0, %s81
      %s99 = sphi 0, %s99
      %s101 = sphi 0, %s99
      %s102 = sphi 0, %s101
      %s116 = sphi 0, %s102
      %s120 = sphi 0, %s120
      %s122 = sphi 0, %s120
      %s123 = sphi 0, %s122
      %s137 = sphi 0, %s123
      %s141 = sphi 0, %s141
      %s143 = sphi 0, %s141
      %s144 = sphi 0, %s143
      %s158 = sphi 0, %s144
      %s162 = sphi 0, %s162
      %s164 = sphi 0, %s162
      %s165 = sphi 0, %s164
      %s179 = sphi 0, %s165
      %s183 = sphi 0, %s183
      %s185 = sphi 0, %s183
      %s186 = sphi 0, %s185
      %s200 = sphi 0, %s186
      %s204 = sphi 0, %s204
      %s206 = sphi 0, %s204
      %s207 = sphi 0, %s206
      %s221 = sphi 0, %s207
      %s225 = sphi 0, %s225
      %s227 = sphi 0, %s225
      %s228 = sphi 0, %s227
      %s242 = sphi 0, %s228
      %s246 = sphi 0, %s246
      %s248 = sphi 0, %s246
      %s249 = sphi 0, %s248
      %s263 = sphi 0, %s249
      %s267 = sphi 0, %s267
      %s269 = sphi 0, %s267
      %s270 = sphi 0, %s269
      %s284 = sphi 0, %s270
      %s288 = sphi 0, %s288
      %s290 = sphi 0, %s288
      %s291 = sphi 0, %s290
      %s305 = sphi 0, %s291
      %s309 = sphi 0, %s309
      %s311 = sphi 0, %s309
      %s312 = sphi 0, %s311
      %s326 = sphi 0, %s312
      %s332 = sphi 0, %s334
      %s335 = sphi 0, %s332
      %s336 = sphi 0, %s335
      %s352 = sphi 0, %s336
    $region4: #{tpu_custom_call.1} parent=1 // loop_header_branch
      %26 = sbr.rel (%p24) target = $region8
    $region5: #{tpu_custom_call.1} parent=1 // loop_body
      %s28 = ssub.s32 %s23, 1
      %s29 = ssub.s32 %s23, 2
      %s30 = sadd.s32 %s23, 1
      %s31 = ssub.s32 %s23, %s30
      %p32 = scmp.eq.s32.totalorder %s31, 0
      %s34 = sadd.s32 %s33, 1
      %s35 = scalar_select %p32, %s33, %s34
      %p38 = pneg %p32
      %p39 = scmp.eq.s32.totalorder %s23, 1
      %p40 = por %p38, %p39
      %p41 = scmp.ne.s32.totalorder %s33, %s36
      %p42 = scmp.eq.s32.totalorder %s23, 0
      %p43 = por %p41, %p42
      %p44 = scmp.ne.s32.totalorder %s33, %s36
      %p45 = scmp.eq.s32.totalorder %s28, 1
      %p46 = por %p44, %p45
      %p47 = scmp.ne.s32.totalorder %s36, %s37
      %p48 = scmp.eq.s32.totalorder %s28, 0
      %p49 = por %p47, %p48
      %p50 = scmp.ne.s32.totalorder %s36, %s37
      %p51 = scmp.eq.s32.totalorder %s29, 1
      %p52 = por %p50, %p51
      %p54 = scmp.ne.s32.totalorder %s37, %s53
      %p55 = scmp.eq.s32.totalorder %s29, 0
      %p56 = por %p54, %p55
      %s58 = sadd.s32 %s57, 1
      %p61 = scmp.eq.s32.totalorder %s23, 1
      %p62 = scmp.ne.s32.totalorder %s57, %s59
      %p63 = scmp.eq.s32.totalorder %s23, 0
      %p64 = por %p62, %p63
      %p65 = scmp.ne.s32.totalorder %s57, %s59
      %p66 = scmp.eq.s32.totalorder %s28, 1
      %p67 = por %p65, %p66
      %p68 = scmp.ne.s32.totalorder %s59, %s60
      %p69 = scmp.eq.s32.totalorder %s28, 0
      %p70 = por %p68, %p69
      %p71 = scmp.ne.s32.totalorder %s59, %s60
      %p72 = scmp.eq.s32.totalorder %s29, 1
      %p73 = por %p71, %p72
      %p75 = scmp.ne.s32.totalorder %s60, %s74
      %p76 = scmp.eq.s32.totalorder %s29, 0
      %p77 = por %p75, %p76
      %s79 = sadd.s32 %s78, 1
      %p82 = scmp.eq.s32.totalorder %s23, 1
      %p83 = scmp.ne.s32.totalorder %s78, %s80
      %p84 = scmp.eq.s32.totalorder %s23, 0
      %p85 = por %p83, %p84
      %p86 = scmp.ne.s32.totalorder %s78, %s80
      %p87 = scmp.eq.s32.totalorder %s28, 1
      %p88 = por %p86, %p87
      %p89 = scmp.ne.s32.totalorder %s80, %s81
      %p90 = scmp.eq.s32.totalorder %s28, 0
      %p91 = por %p89, %p90
      %p92 = scmp.ne.s32.totalorder %s80, %s81
      %p93 = scmp.eq.s32.totalorder %s29, 1
      %p94 = por %p92, %p93
      %p96 = scmp.ne.s32.totalorder %s81, %s95
      %p97 = scmp.eq.s32.totalorder %s29, 0
      %p98 = por %p96, %p97
      %s100 = sadd.s32 %s99, 1
      %p103 = scmp.eq.s32.totalorder %s23, 1
      %p104 = scmp.ne.s32.totalorder %s99, %s101
      %p105 = scmp.eq.s32.totalorder %s23, 0
      %p106 = por %p104, %p105
      %p107 = scmp.ne.s32.totalorder %s99, %s101
      %p108 = scmp.eq.s32.totalorder %s28, 1
      %p109 = por %p107, %p108
      %p110 = scmp.ne.s32.totalorder %s101, %s102
      %p111 = scmp.eq.s32.totalorder %s28, 0
      %p112 = por %p110, %p111
      %p113 = scmp.ne.s32.totalorder %s101, %s102
      %p114 = scmp.eq.s32.totalorder %s29, 1
      %p115 = por %p113, %p114
      %p117 = scmp.ne.s32.totalorder %s102, %s116
      %p118 = scmp.eq.s32.totalorder %s29, 0
      %p119 = por %p117, %p118
      %s121 = sadd.s32 %s120, 1
      %p124 = scmp.eq.s32.totalorder %s23, 1
      %p125 = scmp.ne.s32.totalorder %s120, %s122
      %p126 = scmp.eq.s32.totalorder %s23, 0
      %p127 = por %p125, %p126
      %p128 = scmp.ne.s32.totalorder %s120, %s122
      %p129 = scmp.eq.s32.totalorder %s28, 1
      %p130 = por %p128, %p129
      %p131 = scmp.ne.s32.totalorder %s122, %s123
      %p132 = scmp.eq.s32.totalorder %s28, 0
      %p133 = por %p131, %p132
      %p134 = scmp.ne.s32.totalorder %s122, %s123
      %p135 = scmp.eq.s32.totalorder %s29, 1
      %p136 = por %p134, %p135
      %p138 = scmp.ne.s32.totalorder %s123, %s137
      %p139 = scmp.eq.s32.totalorder %s29, 0
      %p140 = por %p138, %p139
      %s142 = sadd.s32 %s141, 1
      %p145 = scmp.eq.s32.totalorder %s23, 1
      %p146 = scmp.ne.s32.totalorder %s141, %s143
      %p147 = scmp.eq.s32.totalorder %s23, 0
      %p148 = por %p146, %p147
      %p149 = scmp.ne.s32.totalorder %s141, %s143
      %p150 = scmp.eq.s32.totalorder %s28, 1
      %p151 = por %p149, %p150
      %p152 = scmp.ne.s32.totalorder %s143, %s144
      %p153 = scmp.eq.s32.totalorder %s28, 0
      %p154 = por %p152, %p153
      %p155 = scmp.ne.s32.totalorder %s143, %s144
      %p156 = scmp.eq.s32.totalorder %s29, 1
      %p157 = por %p155, %p156
      %p159 = scmp.ne.s32.totalorder %s144, %s158
      %p160 = scmp.eq.s32.totalorder %s29, 0
      %p161 = por %p159, %p160
      %s163 = sadd.s32 %s162, 1
      %p166 = scmp.eq.s32.totalorder %s23, 1
      %p167 = scmp.ne.s32.totalorder %s162, %s164
      %p168 = scmp.eq.s32.totalorder %s23, 0
      %p169 = por %p167, %p168
      %p170 = scmp.ne.s32.totalorder %s162, %s164
      %p171 = scmp.eq.s32.totalorder %s28, 1
      %p172 = por %p170, %p171
      %p173 = scmp.ne.s32.totalorder %s164, %s165
      %p174 = scmp.eq.s32.totalorder %s28, 0
      %p175 = por %p173, %p174
      %p176 = scmp.ne.s32.totalorder %s164, %s165
      %p177 = scmp.eq.s32.totalorder %s29, 1
      %p178 = por %p176, %p177
      %p180 = scmp.ne.s32.totalorder %s165, %s179
      %p181 = scmp.eq.s32.totalorder %s29, 0
      %p182 = por %p180, %p181
      %s184 = sadd.s32 %s183, 1
      %p187 = scmp.eq.s32.totalorder %s23, 1
      %p188 = scmp.ne.s32.totalorder %s183, %s185
      %p189 = scmp.eq.s32.totalorder %s23, 0
      %p190 = por %p188, %p189
      %p191 = scmp.ne.s32.totalorder %s183, %s185
      %p192 = scmp.eq.s32.totalorder %s28, 1
      %p193 = por %p191, %p192
      %p194 = scmp.ne.s32.totalorder %s185, %s186
      %p195 = scmp.eq.s32.totalorder %s28, 0
      %p196 = por %p194, %p195
      %p197 = scmp.ne.s32.totalorder %s185, %s186
      %p198 = scmp.eq.s32.totalorder %s29, 1
      %p199 = por %p197, %p198
      %p201 = scmp.ne.s32.totalorder %s186, %s200
      %p202 = scmp.eq.s32.totalorder %s29, 0
      %p203 = por %p201, %p202
      %s205 = sadd.s32 %s204, 1
      %p208 = scmp.eq.s32.totalorder %s23, 1
      %p209 = scmp.ne.s32.totalorder %s204, %s206
      %p210 = scmp.eq.s32.totalorder %s23, 0
      %p211 = por %p209, %p210
      %p212 = scmp.ne.s32.totalorder %s204, %s206
      %p213 = scmp.eq.s32.totalorder %s28, 1
      %p214 = por %p212, %p213
      %p215 = scmp.ne.s32.totalorder %s206, %s207
      %p216 = scmp.eq.s32.totalorder %s28, 0
      %p217 = por %p215, %p216
      %p218 = scmp.ne.s32.totalorder %s206, %s207
      %p219 = scmp.eq.s32.totalorder %s29, 1
      %p220 = por %p218, %p219
      %p222 = scmp.ne.s32.totalorder %s207, %s221
      %p223 = scmp.eq.s32.totalorder %s29, 0
      %p224 = por %p222, %p223
      %s226 = sadd.s32 %s225, 1
      %p229 = scmp.eq.s32.totalorder %s23, 1
      %p230 = scmp.ne.s32.totalorder %s225, %s227
      %p231 = scmp.eq.s32.totalorder %s23, 0
      %p232 = por %p230, %p231
      %p233 = scmp.ne.s32.totalorder %s225, %s227
      %p234 = scmp.eq.s32.totalorder %s28, 1
      %p235 = por %p233, %p234
      %p236 = scmp.ne.s32.totalorder %s227, %s228
      %p237 = scmp.eq.s32.totalorder %s28, 0
      %p238 = por %p236, %p237
      %p239 = scmp.ne.s32.totalorder %s227, %s228
      %p240 = scmp.eq.s32.totalorder %s29, 1
      %p241 = por %p239, %p240
      %p243 = scmp.ne.s32.totalorder %s228, %s242
      %p244 = scmp.eq.s32.totalorder %s29, 0
      %p245 = por %p243, %p244
      %s247 = sadd.s32 %s246, 1
      %p250 = scmp.eq.s32.totalorder %s23, 1
      %p251 = scmp.ne.s32.totalorder %s246, %s248
      %p252 = scmp.eq.s32.totalorder %s23, 0
      %p253 = por %p251, %p252
      %p254 = scmp.ne.s32.totalorder %s246, %s248
      %p255 = scmp.eq.s32.totalorder %s28, 1
      %p256 = por %p254, %p255
      %p257 = scmp.ne.s32.totalorder %s248, %s249
      %p258 = scmp.eq.s32.totalorder %s28, 0
      %p259 = por %p257, %p258
      %p260 = scmp.ne.s32.totalorder %s248, %s249
      %p261 = scmp.eq.s32.totalorder %s29, 1
      %p262 = por %p260, %p261
      %p264 = scmp.ne.s32.totalorder %s249, %s263
      %p265 = scmp.eq.s32.totalorder %s29, 0
      %p266 = por %p264, %p265
      %s268 = sadd.s32 %s267, 1
      %p271 = scmp.eq.s32.totalorder %s23, 1
      %p272 = scmp.ne.s32.totalorder %s267, %s269
      %p273 = scmp.eq.s32.totalorder %s23, 0
      %p274 = por %p272, %p273
      %p275 = scmp.ne.s32.totalorder %s267, %s269
      %p276 = scmp.eq.s32.totalorder %s28, 1
      %p277 = por %p275, %p276
      %p278 = scmp.ne.s32.totalorder %s269, %s270
      %p279 = scmp.eq.s32.totalorder %s28, 0
      %p280 = por %p278, %p279
      %p281 = scmp.ne.s32.totalorder %s269, %s270
      %p282 = scmp.eq.s32.totalorder %s29, 1
      %p283 = por %p281, %p282
      %p285 = scmp.ne.s32.totalorder %s270, %s284
      %p286 = scmp.eq.s32.totalorder %s29, 0
      %p287 = por %p285, %p286
      %s289 = sadd.s32 %s288, 1
      %p292 = scmp.eq.s32.totalorder %s23, 1
      %p293 = scmp.ne.s32.totalorder %s288, %s290
      %p294 = scmp.eq.s32.totalorder %s23, 0
      %p295 = por %p293, %p294
      %p296 = scmp.ne.s32.totalorder %s288, %s290
      %p297 = scmp.eq.s32.totalorder %s28, 1
      %p298 = por %p296, %p297
      %p299 = scmp.ne.s32.totalorder %s290, %s291
      %p300 = scmp.eq.s32.totalorder %s28, 0
      %p301 = por %p299, %p300
      %p302 = scmp.ne.s32.totalorder %s290, %s291
      %p303 = scmp.eq.s32.totalorder %s29, 1
      %p304 = por %p302, %p303
      %p306 = scmp.ne.s32.totalorder %s291, %s305
      %p307 = scmp.eq.s32.totalorder %s29, 0
      %p308 = por %p306, %p307
      %s310 = sadd.s32 %s309, 1
      %p313 = scmp.eq.s32.totalorder %s23, 1
      %p314 = scmp.ne.s32.totalorder %s309, %s311
      %p315 = scmp.eq.s32.totalorder %s23, 0
      %p316 = por %p314, %p315
      %p317 = scmp.ne.s32.totalorder %s309, %s311
      %p318 = scmp.eq.s32.totalorder %s28, 1
      %p319 = por %p317, %p318
      %p320 = scmp.ne.s32.totalorder %s311, %s312
      %p321 = scmp.eq.s32.totalorder %s28, 0
      %p322 = por %p320, %p321
      %p323 = scmp.ne.s32.totalorder %s311, %s312
      %p324 = scmp.eq.s32.totalorder %s29, 1
      %p325 = por %p323, %p324
      %p327 = scmp.ne.s32.totalorder %s312, %s326
      %p328 = scmp.eq.s32.totalorder %s29, 0
      %p329 = por %p327, %p328
      %s330 = ssub.s32 %s23, %s30
      %p331 = scmp.eq.s32.totalorder %s330, 0
      %s333 = sadd.s32 %s332, 1
      %s334 = scalar_select %p331, %s332, %s333
      %p337 = pneg %p331
      %p338 = scmp.eq.s32.totalorder %s23, 1
      %p339 = por %p337, %p338
      %p340 = scmp.ne.s32.totalorder %s332, %s335
      %p341 = scmp.eq.s32.totalorder %s23, 0
      %p342 = por %p340, %p341
      %p343 = scmp.ne.s32.totalorder %s332, %s335
      %p344 = scmp.eq.s32.totalorder %s28, 1
      %p345 = por %p343, %p344
      %p346 = scmp.ne.s32.totalorder %s335, %s336
      %p347 = scmp.eq.s32.totalorder %s28, 0
      %p348 = por %p346, %p347
      %p349 = scmp.ne.s32.totalorder %s335, %s336
      %p350 = scmp.eq.s32.totalorder %s29, 1
      %p351 = por %p349, %p350
      %p353 = scmp.ne.s32.totalorder %s336, %s352
      %p354 = scmp.eq.s32.totalorder %s29, 0
      %p355 = por %p353, %p354
      %p356 = scmp.le.s32.totalorder 1, %s23
      %p357 = scmp.lt.s32.totalorder %s23, 3
      %p358 = pnand %p356, %p357
      %p359 = pneg %p358
      // Predicated region
      $region9: #{tpu_custom_call.1} parent=5 // pred_check
        _
      $region10: #{tpu_custom_call.1} parent=5 // pred_check_branch
        %361 = sbr.rel (%p358) target = $region12
      $region11: #{tpu_custom_call.1} parent=5 // pred_region
        %s362 = ssub.s32 %s23, 1
        // Predicated region
        $region13: #{tpu_custom_call.1} parent=11 // pred_check
          %p363 = pneg %p70
        $region14: #{tpu_custom_call.1} parent=11 // pred_check_branch
          %365 = sbr.rel (%p363) target = $region16
        $region15: #{tpu_custom_call.1} parent=11 // pred_region
          _
        $region16: #{tpu_custom_call.1} parent=11 // pred_fallthru
          _
        // Predicated region
        $region17: #{tpu_custom_call.1} parent=11 // pred_check
          %p366 = pneg %p91
        $region18: #{tpu_custom_call.1} parent=11 // pred_check_branch
          %368 = sbr.rel (%p366) target = $region20
        $region19: #{tpu_custom_call.1} parent=11 // pred_region
          _
        $region20: #{tpu_custom_call.1} parent=11 // pred_fallthru
          _
        // Predicated region
        $region21: #{tpu_custom_call.1} parent=11 // pred_check
          %p369 = pneg %p112
        $region22: #{tpu_custom_call.1} parent=11 // pred_check_branch
          %371 = sbr.rel (%p369) target = $region24
        $region23: #{tpu_custom_call.1} parent=11 // pred_region
          _
        $region24: #{tpu_custom_call.1} parent=11 // pred_fallthru
          _
        // Predicated region
        $region25: #{tpu_custom_call.1} parent=11 // pred_check
          %p372 = pneg %p133
        $region26: #{tpu_custom_call.1} parent=11 // pred_check_branch
          %374 = sbr.rel (%p372) target = $region28
        $region27: #{tpu_custom_call.1} parent=11 // pred_region
          _
        $region28: #{tpu_custom_call.1} parent=11 // pred_fallthru
          _
        // Predicated region
        $region29: #{tpu_custom_call.1} parent=11 // pred_check
          %p375 = pneg %p154
        $region30: #{tpu_custom_call.1} parent=11 // pred_check_branch
          %377 = sbr.rel (%p375) target = $region32
        $region31: #{tpu_custom_call.1} parent=11 // pred_region
          _
        $region32: #{tpu_custom_call.1} parent=11 // pred_fallthru
          _
        // Predicated region
        $region33: #{tpu_custom_call.1} parent=11 // pred_check
          %p378 = pneg %p175
        $region34: #{tpu_custom_call.1} parent=11 // pred_check_branch
          %380 = sbr.rel (%p378) target = $region36
        $region35: #{tpu_custom_call.1} parent=11 // pred_region
          _
        $region36: #{tpu_custom_call.1} parent=11 // pred_fallthru
          _
        // Predicated region
        $region37: #{tpu_custom_call.1} parent=11 // pred_check
          %p381 = pneg %p196
        $region38: #{tpu_custom_call.1} parent=11 // pred_check_branch
          %383 = sbr.rel (%p381) target = $region40
        $region39: #{tpu_custom_call.1} parent=11 // pred_region
          _
        $region40: #{tpu_custom_call.1} parent=11 // pred_fallthru
          _
        // Predicated region
        $region41: #{tpu_custom_call.1} parent=11 // pred_check
          %p384 = pneg %p217
        $region42: #{tpu_custom_call.1} parent=11 // pred_check_branch
          %386 = sbr.rel (%p384) target = $region44
        $region43: #{tpu_custom_call.1} parent=11 // pred_region
          _
        $region44: #{tpu_custom_call.1} parent=11 // pred_fallthru
          _
        // Predicated region
        $region45: #{tpu_custom_call.1} parent=11 // pred_check
          %p387 = pneg %p238
        $region46: #{tpu_custom_call.1} parent=11 // pred_check_branch
          %389 = sbr.rel (%p387) target = $region48
        $region47: #{tpu_custom_call.1} parent=11 // pred_region
          _
        $region48: #{tpu_custom_call.1} parent=11 // pred_fallthru
          _
        // Predicated region
        $region49: #{tpu_custom_call.1} parent=11 // pred_check
          %p390 = pneg %p259
        $region50: #{tpu_custom_call.1} parent=11 // pred_check_branch
          %392 = sbr.rel (%p390) target = $region52
        $region51: #{tpu_custom_call.1} parent=11 // pred_region
          _
        $region52: #{tpu_custom_call.1} parent=11 // pred_fallthru
          _
        // Predicated region
        $region53: #{tpu_custom_call.1} parent=11 // pred_check
          %p393 = pneg %p280
        $region54: #{tpu_custom_call.1} parent=11 // pred_check_branch
          %395 = sbr.rel (%p393) target = $region56
        $region55: #{tpu_custom_call.1} parent=11 // pred_region
          _
        $region56: #{tpu_custom_call.1} parent=11 // pred_fallthru
          _
        // Predicated region
        $region57: #{tpu_custom_call.1} parent=11 // pred_check
          %p396 = pneg %p301
        $region58: #{tpu_custom_call.1} parent=11 // pred_check_branch
          %398 = sbr.rel (%p396) target = $region60
        $region59: #{tpu_custom_call.1} parent=11 // pred_region
          _
        $region60: #{tpu_custom_call.1} parent=11 // pred_fallthru
          _
        // Predicated region
        $region61: #{tpu_custom_call.1} parent=11 // pred_check
          %p399 = pneg %p322
        $region62: #{tpu_custom_call.1} parent=11 // pred_check_branch
          %401 = sbr.rel (%p399) target = $region64
        $region63: #{tpu_custom_call.1} parent=11 // pred_region
          _
        $region64: #{tpu_custom_call.1} parent=11 // pred_fallthru
          _
      $region12: #{tpu_custom_call.1} parent=5 // pred_fallthru
        _
      %p402 = scmp.lt.s32.totalorder %s23, 2
      // Predicated region
      $region65: #{tpu_custom_call.1} parent=5 // pred_check
        %p403 = pneg %p402
      $region66: #{tpu_custom_call.1} parent=5 // pred_check_branch
        %405 = sbr.rel (%p403) target = $region68
      $region67: #{tpu_custom_call.1} parent=5 // pred_region
        // Predicated region
        $region69: #{tpu_custom_call.1} parent=67 // pred_check
          %p406 = pneg %p43
        $region70: #{tpu_custom_call.1} parent=67 // pred_check_branch
          %408 = sbr.rel (%p406) target = $region72
        $region71: #{tpu_custom_call.1} parent=67 // pred_region
          %s409 = sand.u32 %s33, 1
          %s410 = sand.u32 %s33, 1
          %s411 = smul.addr %s410, 32
          %s412 = scalar_lea.vmem [#allocation2], %s411
          %s413 = smul.addr %s23, 8
          %s414 = scalar_lea.vmem %s0, %s413
          // Predicated region
          $region73: #{tpu_custom_call.1} parent=71 // pred_check
            _
          $region74: #{tpu_custom_call.1} parent=71 // pred_check_branch
            %416 = sbr.rel (0) target = $region76
          $region75: #{tpu_custom_call.1} parent=71 // pred_region
            // Predicated region
            $region77: #{tpu_custom_call.1} parent=75 // pred_check
              _
            $region78: #{tpu_custom_call.1} parent=75 // pred_check_branch
              %418 = sbr.rel (0) target = $region80
            $region79: #{tpu_custom_call.1} parent=75 // pred_region
              // Predicated region
              $region92: #{tpu_custom_call.1} parent=79 // pred_check
                _
              $region93: #{tpu_custom_call.1} parent=79 // pred_check_branch
                %440 = sbr.rel (0) target = $region95
              $region94: #{tpu_custom_call.1} parent=79 // pred_region
                loop: start=0, step=1, limit=1
                $region96: #{tpu_custom_call.1} parent=94 // loop_pre_header
                  _
                $region97: #{tpu_custom_call.1} parent=94 // loop_header
                  %s442 = sphi 0, %s446
                  %p443 = scmp.ge.s32.totalorder %s442, 1
                  %s447 = sphi %s414, %s414
                  %s448 = sphi %s412, %s412
                $region98: #{tpu_custom_call.1} parent=94 // loop_header_branch
                  %445 = sbr.rel (%p443) target = $region102
                $region99: #{tpu_custom_call.1} parent=94 // loop_body
                  %v449 = vld [vmem:[%s447] sm:$0xff]
                  %450 = vst [vmem:[%s448] sm:$0xff] %v449
                  %v451 = vld [vmem:[%s447 + $0x10] sm:$0xff]
                  %452 = vst [vmem:[%s448 + $0x8] sm:$0xff] %v451
                  %v453 = vld [vmem:[%s447 + $0x20] sm:$0xff]
                  %454 = vst [vmem:[%s448 + $0x10] sm:$0xff] %v453
                  %v455 = vld [vmem:[%s447 + $0x30] sm:$0xff]
                  %456 = vst [vmem:[%s448 + $0x18] sm:$0xff] %v455
                $region100: #{tpu_custom_call.1} parent=94 // loop_footer
                  %s446 = sadd.s32 1, %s442
                $region101: #{tpu_custom_call.1} parent=94 // loop_footer_branch
                  %441 = sbr.rel target = $region97
                $region102: #{tpu_custom_call.1} parent=94 // loop_exit
                  _
              $region95: #{tpu_custom_call.1} parent=79 // pred_fallthru
                _
              // Predicated region
              $region103: #{tpu_custom_call.1} parent=79 // pred_check
                _
              $region104: #{tpu_custom_call.1} parent=79 // pred_check_branch
                %458 = sbr.rel target = $region106
              $region105: #{tpu_custom_call.1} parent=79 // pred_region
                _
              $region106: #{tpu_custom_call.1} parent=79 // pred_fallthru
                _
            $region80: #{tpu_custom_call.1} parent=75 // pred_fallthru
              _
            // Predicated region
            $region81: #{tpu_custom_call.1} parent=75 // pred_check
              _
            $region82: #{tpu_custom_call.1} parent=75 // pred_check_branch
              %420 = sbr.rel target = $region84
            $region83: #{tpu_custom_call.1} parent=75 // pred_region
              %s422 = ssub.s32 256, 1
              loop: start=0, step=1, limit=1
              $region85: #{tpu_custom_call.1} parent=83 // loop_pre_header
                _
              $region86: #{tpu_custom_call.1} parent=83 // loop_header
                %s424 = sphi 0, %s428
                %p425 = scmp.ge.s32.totalorder %s424, 1
                %s429 = sphi %s414, %s414
                %s430 = sphi %s412, %s412
              $region87: #{tpu_custom_call.1} parent=83 // loop_header_branch
                %427 = sbr.rel (%p425) target = $region91
              $region88: #{tpu_custom_call.1} parent=83 // loop_body
                %v431 = vld [vmem:[%s429] sm:%s422]
                %432 = vst [vmem:[%s430] sm:%s422] %v431
                %v433 = vld [vmem:[%s429 + $0x10] sm:%s422]
                %434 = vst [vmem:[%s430 + $0x8] sm:%s422] %v433
                %v435 = vld [vmem:[%s429 + $0x20] sm:%s422]
                %436 = vst [vmem:[%s430 + $0x10] sm:%s422] %v435
                %v437 = vld [vmem:[%s429 + $0x30] sm:%s422]
                %438 = vst [vmem:[%s430 + $0x18] sm:%s422] %v437
              $region89: #{tpu_custom_call.1} parent=83 // loop_footer
                %s428 = sadd.s32 1, %s424
              $region90: #{tpu_custom_call.1} parent=83 // loop_footer_branch
                %423 = sbr.rel target = $region86
              $region91: #{tpu_custom_call.1} parent=83 // loop_exit
                _
            $region84: #{tpu_custom_call.1} parent=75 // pred_fallthru
              _
          $region76: #{tpu_custom_call.1} parent=71 // pred_fallthru
            _
          %459 = vnop
        $region72: #{tpu_custom_call.1} parent=67 // pred_fallthru
          _
      $region68: #{tpu_custom_call.1} parent=5 // pred_fallthru
        _
      %p460 = scmp.le.s32.totalorder 1, %s23
      %p461 = scmp.lt.s32.totalorder %s23, 3
      %p462 = pnand %p460, %p461
      %p463 = pneg %p462
      // Predicated region
      $region107: #{tpu_custom_call.1} parent=5 // pred_check
        _
      $region108: #{tpu_custom_call.1} parent=5 // pred_check_branch
        %465 = sbr.rel (%p462) target = $region110
      $region109: #{tpu_custom_call.1} parent=5 // pred_region
        %s466 = ssub.s32 %s23, 1
        %s467 = sand.u32 %s36, 1
        %s468 = sand.u32 %s36, 1
        %s469 = smul.addr %s468, 32
        %s470 = scalar_lea.vmem [#allocation2], %s469
        // Predicated region
        $region111: #{tpu_custom_call.1} parent=109 // pred_check
          %p471 = pneg %p49
        $region112: #{tpu_custom_call.1} parent=109 // pred_check_branch
          %473 = sbr.rel (%p471) target = $region114
        $region113: #{tpu_custom_call.1} parent=109 // pred_region
          _
        $region114: #{tpu_custom_call.1} parent=109 // pred_fallthru
          _
        %s474 = sand.u32 %s36, 1
        %s475 = sand.u32 %s36, 1
        %s476 = smul.addr %s475, 32
        %s477 = scalar_lea.vmem [#allocation2], %s476
        %p478 = pneg %p49
        %p479 = pneg %p46
        %p480 = pneg %p70
        %p481 = pneg %p67
        %p482 = pneg %p91
        %p483 = pneg %p88
        %p484 = pneg %p112
        %p485 = pneg %p109
        %p486 = pneg %p133
        %p487 = pneg %p130
        %p488 = pneg %p154
        %p489 = pneg %p151
        %p490 = pneg %p175
        %p491 = pneg %p172
        %p492 = pneg %p196
        %p493 = pneg %p193
        %p494 = pneg %p217
        %p495 = pneg %p214
        %p496 = pneg %p238
        %p497 = pneg %p235
        %p498 = pneg %p259
        %p499 = pneg %p256
        %p500 = pneg %p280
        %p501 = pneg %p277
        %p502 = pneg %p301
        %p503 = pneg %p298
        %p504 = pneg %p322
        %p505 = pneg %p319
        %p506 = pneg %p348
        %p507 = pneg %p345
        %s508 = sand.u32 %s335, 1
        %s509 = scalar_lea.sflag [#allocation4], %s508
        %s510 = sand.u32 %s335, 1
        %s511 = smul.addr %s510, 32
        %s512 = scalar_lea.vmem [#allocation3], %s511
        %v513 = vld [vmem:[%s470] sm:$0xff]
        %v514 = vld [vmem:[%s470 + $0x8] sm:$0xff]
        %v515 = vld [vmem:[%s470 + $0x10] sm:$0xff]
        %v516 = vld [vmem:[%s470 + $0x18] sm:$0xff]
        %v517 = vld [vmem:[%s9] sm:$0xff]
        %v518 = vld [vmem:[%s9 + $0x8] sm:$0xff]
        %v519 = vld [vmem:[%s9 + $0x10] sm:$0xff]
        %v520 = vld [vmem:[%s9 + $0x18] sm:$0xff]
        %v521 = vld [vmem:[%s9 + $0x20] sm:$0xff]
        %v522 = vld [vmem:[%s9 + $0x28] sm:$0xff]
        %v523 = vld [vmem:[%s9 + $0x30] sm:$0xff]
        %v524 = vld [vmem:[%s9 + $0x38] sm:$0xff]
        %v525 = vld [vmem:[%s9 + $0x40] sm:$0xff]
        %v526 = vld [vmem:[%s9 + $0x48] sm:$0xff]
        %v527 = vld [vmem:[%s9 + $0x50] sm:$0xff]
        %v528 = vld [vmem:[%s9 + $0x58] sm:$0xff]
        %v529 = vld [vmem:[%s9 + $0x60] sm:$0xff]
        %v530 = vld [vmem:[%s9 + $0x68] sm:$0xff]
        %v531 = vld [vmem:[%s9 + $0x70] sm:$0xff]
        %v532 = vld [vmem:[%s9 + $0x78] sm:$0xff]
        %v533 = vld [vmem:[%s10] sm:$0xff]
        %v534 = vld [vmem:[%s10 + $0x8] sm:$0xff]
        %v535 = vld [vmem:[%s10 + $0x10] sm:$0xff]
        %v536 = vld [vmem:[%s10 + $0x18] sm:$0xff]
        %v537 = vld [vmem:[%s11] sm:$0x3]
        %v538 = vld [vmem:[%s12] sm:$0x1]
        %v539 = vld [vmem:[%s13] sm:$0x1]
        %540 = vrot.lane.b32.xlu0 %v513, 1
        %v541 = vpop.permute.xlu0 %540
        %542 = vrot.lane.b32.xlu0 %v514, 1
        %v543 = vpop.permute.xlu0 %542
        %544 = vrot.lane.b32.xlu0 %v515, 1
        %v545 = vpop.permute.xlu0 %544
        %546 = vrot.lane.b32.xlu0 %v516, 1
        %v547 = vpop.permute.xlu0 %546
        %v549 = vperm.slane %v538, 0
        %v551 = vmul.f32 %v541, %v549
        %v552 = vmul.f32 %v543, %v549
        %v553 = vmul.f32 %v545, %v549
        %v554 = vmul.f32 %v547, %v549
        %555 = vrot.lane.b32.xlu0 %v513, 127
        %v556 = vpop.permute.xlu0 %555
        %557 = vrot.lane.b32.xlu0 %v514, 127
        %v558 = vpop.permute.xlu0 %557
        %559 = vrot.lane.b32.xlu0 %v515, 127
        %v560 = vpop.permute.xlu0 %559
        %561 = vrot.lane.b32.xlu0 %v516, 127
        %v562 = vpop.permute.xlu0 %561
        %v564 = vperm.slane %v539, 0
        %v566 = vmul.f32 %v556, %v564
        %v567 = vmul.f32 %v558, %v564
        %v568 = vmul.f32 %v560, %v564
        %v569 = vmul.f32 %v562, %v564
        %v570 = vld [vmem:[%s1] sm:$0xff]
        %v571 = vld [vmem:[%s1 + $0x8] sm:$0xff]
        %v572 = vld [vmem:[%s1 + $0x10] sm:$0xff]
        %v573 = vld [vmem:[%s1 + $0x18] sm:$0xff]
        %s574 = scalar_lea.vmem %s1, 32
        %v575 = vld [vmem:[%s574] sm:$0xff]
        %v576 = vld [vmem:[%s574 + $0x8] sm:$0xff]
        %v577 = vld [vmem:[%s574 + $0x10] sm:$0xff]
        %v578 = vld [vmem:[%s574 + $0x18] sm:$0xff]
        %vm579 = vcmask 261120
        %v581 = vsel %vm579, %v575, 0
        %v584 = vsel %vm579, %v576, 0
        %v587 = vsel %vm579, %v577, 0
        %v590 = vsel %vm579, %v578, 0
        %592 = vmatpush.msra.mxu0 0.0
        %593 = vmatpush.msra.mxu0 0.0
        %594 = vmatpush.msra.mxu0 0.0
        %595 = vmatpush.msra.mxu0 0.0
        %596 = vmatpush.msra.mxu0 0.0
        %597 = vmatpush.msra.mxu0 0.0
        %598 = vmatpush.msra.mxu0 0.0
        %599 = vmatpush.msra.mxu0 0.0
        %600 = vmatpush.msra.mxu0 0.0
        %601 = vmatpush.msra.mxu0 0.0
        %602 = vmatpush.msra.mxu0 0.0
        %603 = vmatpush.msra.mxu0 0.0
        %604 = vmatpush.msra.mxu0 %v516
        %605 = vmatpush.msra.mxu0 %v515
        %606 = vmatpush.msra.mxu0 %v514
        %607 = vmatpush.msra.mxu0 %v513
        %608 = vmatmul.f32.gmra.mxu0 %v581
        %v609 = vpop.f32.mrf.mxu0
        %v610 = vadd.f32 0.0, %v609
        %611 = vmatmul.f32.gmra.mxu0 %v584
        %v612 = vpop.f32.mrf.mxu0
        %v613 = vadd.f32 0.0, %v612
        %614 = vmatmul.f32.gmra.mxu0 %v587
        %v615 = vpop.f32.mrf.mxu0
        %v616 = vadd.f32 0.0, %v615
        %617 = vmatmul.f32.gmra.mxu0 %v590
        %v618 = vpop.f32.mrf.mxu0
        %v619 = vadd.f32 0.0, %v618
        %620 = vdwg.mxu0
        %v622 = vsel %vm579, %v570, 0
        %v625 = vsel %vm579, %v571, 0
        %v628 = vsel %vm579, %v572, 0
        %v631 = vsel %vm579, %v573, 0
        %633 = vmatpush.msra.mxu0 0.0
        %634 = vmatpush.msra.mxu0 0.0
        %635 = vmatpush.msra.mxu0 0.0
        %636 = vmatpush.msra.mxu0 0.0
        %637 = vmatpush.msra.mxu0 0.0
        %638 = vmatpush.msra.mxu0 0.0
        %639 = vmatpush.msra.mxu0 0.0
        %640 = vmatpush.msra.mxu0 0.0
        %641 = vmatpush.msra.mxu0 0.0
        %642 = vmatpush.msra.mxu0 0.0
        %643 = vmatpush.msra.mxu0 0.0
        %644 = vmatpush.msra.mxu0 0.0
        %645 = vmatpush.msra.mxu0 %v554
        %646 = vmatpush.msra.mxu0 %v553
        %647 = vmatpush.msra.mxu0 %v552
        %648 = vmatpush.msra.mxu0 %v551
        %649 = vmatmul.f32.gmra.mxu0 %v622
        %v650 = vpop.f32.mrf.mxu0
        %v651 = vadd.f32 %v610, %v650
        %652 = vmatmul.f32.gmra.mxu0 %v625
        %v653 = vpop.f32.mrf.mxu0
        %v654 = vadd.f32 %v613, %v653
        %655 = vmatmul.f32.gmra.mxu0 %v628
        %v656 = vpop.f32.mrf.mxu0
        %v657 = vadd.f32 %v616, %v656
        %658 = vmatmul.f32.gmra.mxu0 %v631
        %v659 = vpop.f32.mrf.mxu0
        %v660 = vadd.f32 %v619, %v659
        %661 = vdwg.mxu0
        %s662 = scalar_lea.vmem %s1, 64
        %v663 = vld [vmem:[%s662] sm:$0xff]
        %v664 = vld [vmem:[%s662 + $0x8] sm:$0xff]
        %v665 = vld [vmem:[%s662 + $0x10] sm:$0xff]
        %v666 = vld [vmem:[%s662 + $0x18] sm:$0xff]
        %v668 = vsel %vm579, %v663, 0
        %v671 = vsel %vm579, %v664, 0
        %v674 = vsel %vm579, %v665, 0
        %v677 = vsel %vm579, %v666, 0
        %679 = vmatpush.msra.mxu0 0.0
        %680 = vmatpush.msra.mxu0 0.0
        %681 = vmatpush.msra.mxu0 0.0
        %682 = vmatpush.msra.mxu0 0.0
        %683 = vmatpush.msra.mxu0 0.0
        %684 = vmatpush.msra.mxu0 0.0
        %685 = vmatpush.msra.mxu0 0.0
        %686 = vmatpush.msra.mxu0 0.0
        %687 = vmatpush.msra.mxu0 0.0
        %688 = vmatpush.msra.mxu0 0.0
        %689 = vmatpush.msra.mxu0 0.0
        %690 = vmatpush.msra.mxu0 0.0
        %691 = vmatpush.msra.mxu0 %v569
        %692 = vmatpush.msra.mxu0 %v568
        %693 = vmatpush.msra.mxu0 %v567
        %694 = vmatpush.msra.mxu0 %v566
        %695 = vmatmul.f32.gmra.mxu0 %v668
        %v696 = vpop.f32.mrf.mxu0
        %v697 = vadd.f32 0.0, %v696
        %698 = vmatmul.f32.gmra.mxu0 %v671
        %v699 = vpop.f32.mrf.mxu0
        %v700 = vadd.f32 0.0, %v699
        %701 = vmatmul.f32.gmra.mxu0 %v674
        %v702 = vpop.f32.mrf.mxu0
        %v703 = vadd.f32 0.0, %v702
        %704 = vmatmul.f32.gmra.mxu0 %v677
        %v705 = vpop.f32.mrf.mxu0
        %v706 = vadd.f32 0.0, %v705
        %707 = vdwg.mxu0
        %v708 = vadd.f32 %v651, %v697
        %v709 = vadd.f32 %v654, %v700
        %v710 = vadd.f32 %v657, %v703
        %v711 = vadd.f32 %v660, %v706
        %v712 = vld [vmem:[%s2] sm:$0xff]
        %v713 = vld [vmem:[%s2 + $0x8] sm:$0xff]
        %v714 = vld [vmem:[%s2 + $0x10] sm:$0xff]
        %v715 = vld [vmem:[%s2 + $0x18] sm:$0xff]
        %717 = vset.pattern.permute.xlu0 0
        %718 = vperm.xlu0 %717, %v712
        %v719 = vpop.permute.xlu0 %718
        %722 = vset.pattern.permute.xlu0 0
        %723 = vperm.xlu0 %722, %v713
        %v724 = vpop.permute.xlu0 %723
        %727 = vset.pattern.permute.xlu0 0
        %728 = vperm.xlu0 %727, %v714
        %v729 = vpop.permute.xlu0 %728
        %732 = vset.pattern.permute.xlu0 0
        %733 = vperm.xlu0 %732, %v715
        %v734 = vpop.permute.xlu0 %733
        %v736 = vadd.f32 %v708, %v719
        %v737 = vadd.f32 %v709, %v724
        %v738 = vadd.f32 %v710, %v729
        %v739 = vadd.f32 %v711, %v734
        %740 = vmatpush.msra.mxu0 %v532
        %741 = vmatpush.msra.mxu0 %v531
        %742 = vmatpush.msra.mxu0 %v530
        %743 = vmatpush.msra.mxu0 %v529
        %744 = vmatpush.msra.mxu0 %v528
        %745 = vmatpush.msra.mxu0 %v527
        %746 = vmatpush.msra.mxu0 %v526
        %747 = vmatpush.msra.mxu0 %v525
        %748 = vmatpush.msra.mxu0 %v524
        %749 = vmatpush.msra.mxu0 %v523
        %750 = vmatpush.msra.mxu0 %v522
        %751 = vmatpush.msra.mxu0 %v521
        %752 = vmatpush.msra.mxu0 %v520
        %753 = vmatpush.msra.mxu0 %v519
        %754 = vmatpush.msra.mxu0 %v518
        %755 = vmatpush.msra.mxu0 %v517
        %756 = vmatmul.f32.gmra.mxu0 %v736
        %v757 = vpop.f32.mrf.mxu0
        %v758 = vadd.f32 0.0, %v757
        %759 = vmatmul.f32.gmra.mxu0 %v737
        %v760 = vpop.f32.mrf.mxu0
        %v761 = vadd.f32 0.0, %v760
        %762 = vmatmul.f32.gmra.mxu0 %v738
        %v763 = vpop.f32.mrf.mxu0
        %v764 = vadd.f32 0.0, %v763
        %765 = vmatmul.f32.gmra.mxu0 %v739
        %v766 = vpop.f32.mrf.mxu0
        %v767 = vadd.f32 0.0, %v766
        %768 = vdwg.mxu0
        %v769 = vmul.f32 %v736, %v736
        %v770 = vmul.f32 %v737, %v737
        %v771 = vmul.f32 %v738, %v738
        %v772 = vmul.f32 %v739, %v739
        %773 = vmatpush.msra.mxu0 %v532
        %774 = vmatpush.msra.mxu0 %v531
        %775 = vmatpush.msra.mxu0 %v530
        %776 = vmatpush.msra.mxu0 %v529
        %777 = vmatpush.msra.mxu0 %v528
        %778 = vmatpush.msra.mxu0 %v527
        %779 = vmatpush.msra.mxu0 %v526
        %780 = vmatpush.msra.mxu0 %v525
        %781 = vmatpush.msra.mxu0 %v524
        %782 = vmatpush.msra.mxu0 %v523
        %783 = vmatpush.msra.mxu0 %v522
        %784 = vmatpush.msra.mxu0 %v521
        %785 = vmatpush.msra.mxu0 %v520
        %786 = vmatpush.msra.mxu0 %v519
        %787 = vmatpush.msra.mxu0 %v518
        %788 = vmatpush.msra.mxu0 %v517
        %789 = vmatmul.f32.gmra.mxu0 %v769
        %v790 = vpop.f32.mrf.mxu0
        %v791 = vadd.f32 0.0, %v790
        %792 = vmatmul.f32.gmra.mxu0 %v770
        %v793 = vpop.f32.mrf.mxu0
        %v794 = vadd.f32 0.0, %v793
        %795 = vmatmul.f32.gmra.mxu0 %v771
        %v796 = vpop.f32.mrf.mxu0
        %v797 = vadd.f32 0.0, %v796
        %798 = vmatmul.f32.gmra.mxu0 %v772
        %v799 = vpop.f32.mrf.mxu0
        %v800 = vadd.f32 0.0, %v799
        %801 = vdwg.mxu0
        %806 = vrot.lane.b32.xlu0 %v791, 2
        %v807 = vpop.permute.xlu0 %806
        %808 = vrot.lane.b32.xlu0 %v794, 2
        %v809 = vpop.permute.xlu0 %808
        %810 = vrot.lane.b32.xlu0 %v797, 2
        %v811 = vpop.permute.xlu0 %810
        %812 = vrot.lane.b32.xlu0 %v800, 2
        %v813 = vpop.permute.xlu0 %812
        %vm818 = vcmask 15360
        %v819 = vsel %vm818, %v758, %v807
        %v820 = vsel %vm818, %v761, %v809
        %v821 = vsel %vm818, %v764, %v811
        %v822 = vsel %vm818, %v767, %v813
        %v824 = vsel %vm579, %v533, 0
        %v827 = vsel %vm579, %v534, 0
        %v830 = vsel %vm579, %v535, 0
        %v833 = vsel %vm579, %v536, 0
        %835 = vmatpush.msra.mxu0 0.0
        %836 = vmatpush.msra.mxu0 0.0
        %837 = vmatpush.msra.mxu0 0.0
        %838 = vmatpush.msra.mxu0 0.0
        %839 = vmatpush.msra.mxu0 0.0
        %840 = vmatpush.msra.mxu0 0.0
        %841 = vmatpush.msra.mxu0 0.0
        %842 = vmatpush.msra.mxu0 0.0
        %843 = vmatpush.msra.mxu0 0.0
        %844 = vmatpush.msra.mxu0 0.0
        %845 = vmatpush.msra.mxu0 0.0
        %846 = vmatpush.msra.mxu0 0.0
        %847 = vmatpush.msra.mxu0 %v822
        %848 = vmatpush.msra.mxu0 %v821
        %849 = vmatpush.msra.mxu0 %v820
        %850 = vmatpush.msra.mxu0 %v819
        %851 = vmatmul.f32.gmra.mxu0 %v824
        %v852 = vpop.f32.mrf.mxu0
        %v853 = vadd.f32 0.0, %v852
        %854 = vmatmul.f32.gmra.mxu0 %v827
        %v855 = vpop.f32.mrf.mxu0
        %v856 = vadd.f32 0.0, %v855
        %857 = vmatmul.f32.gmra.mxu0 %v830
        %v858 = vpop.f32.mrf.mxu0
        %v859 = vadd.f32 0.0, %v858
        %860 = vmatmul.f32.gmra.mxu0 %v833
        %v861 = vpop.f32.mrf.mxu0
        %v862 = vadd.f32 0.0, %v861
        %863 = vdwg.mxu0
        %v864 = vmul.f32 %v853, %v853
        %v865 = vmul.f32 %v856, %v856
        %v866 = vmul.f32 %v859, %v859
        %v867 = vmul.f32 %v862, %v862
        %872 = vrot.lane.b32.xlu0 %v864, 2
        %v873 = vpop.permute.xlu0 %872
        %874 = vrot.lane.b32.xlu0 %v865, 2
        %v875 = vpop.permute.xlu0 %874
        %876 = vrot.lane.b32.xlu0 %v866, 2
        %v877 = vpop.permute.xlu0 %876
        %878 = vrot.lane.b32.xlu0 %v867, 2
        %v879 = vpop.permute.xlu0 %878
        %v884 = vsub.f32 %v853, %v873
        %v885 = vsub.f32 %v856, %v875
        %v886 = vsub.f32 %v859, %v877
        %v887 = vsub.f32 %v862, %v879
        %v888 = vadd.f32 %v884, 1e-05
        %v889 = vadd.f32 %v885, 1e-05
        %v890 = vadd.f32 %v886, 1e-05
        %v891 = vadd.f32 %v887, 1e-05
        %v892 = vrsqrt.pop %v888
        %v893 = vmul.f32 %v892, %v888
        %v894 = vmul.f32 %v893, %v892
        %v895 = vmul.f32 0.5, %v894
        %v896 = vsub.f32 1.5, %v895
        %v897 = vmul.f32 %v892, %v896
        %vm898 = vweird.f32 %v888
        %vm899 = vweird.f32 %v892
        %vm900 = vmor %vm898, %vm899
        %v901 = vsel %vm900, %v892, %v897
        %v902 = vrsqrt.pop %v889
        %v903 = vmul.f32 %v902, %v889
        %v904 = vmul.f32 %v903, %v902
        %v905 = vmul.f32 0.5, %v904
        %v906 = vsub.f32 1.5, %v905
        %v907 = vmul.f32 %v902, %v906
        %vm908 = vweird.f32 %v889
        %vm909 = vweird.f32 %v902
        %vm910 = vmor %vm908, %vm909
        %v911 = vsel %vm910, %v902, %v907
        %v912 = vrsqrt.pop %v890
        %v913 = vmul.f32 %v912, %v890
        %v914 = vmul.f32 %v913, %v912
        %v915 = vmul.f32 0.5, %v914
        %v916 = vsub.f32 1.5, %v915
        %v917 = vmul.f32 %v912, %v916
        %vm918 = vweird.f32 %v890
        %vm919 = vweird.f32 %v912
        %vm920 = vmor %vm918, %vm919
        %v921 = vsel %vm920, %v912, %v917
        %v922 = vrsqrt.pop %v891
        %v923 = vmul.f32 %v922, %v891
        %v924 = vmul.f32 %v923, %v922
        %v925 = vmul.f32 0.5, %v924
        %v926 = vsub.f32 1.5, %v925
        %v927 = vmul.f32 %v922, %v926
        %vm928 = vweird.f32 %v891
        %vm929 = vweird.f32 %v922
        %vm930 = vmor %vm928, %vm929
        %v931 = vsel %vm930, %v922, %v927
        %v932 = vld [vmem:[%s3] sm:$0xff]
        %v933 = vld [vmem:[%s3 + $0x8] sm:$0xff]
        %v934 = vld [vmem:[%s3 + $0x10] sm:$0xff]
        %v935 = vld [vmem:[%s3 + $0x18] sm:$0xff]
        %937 = vset.pattern.permute.xlu0 0
        %938 = vperm.xlu0 %937, %v932
        %v939 = vpop.permute.xlu0 %938
        %942 = vset.pattern.permute.xlu0 0
        %943 = vperm.xlu0 %942, %v933
        %v944 = vpop.permute.xlu0 %943
        %947 = vset.pattern.permute.xlu0 0
        %948 = vperm.xlu0 %947, %v934
        %v949 = vpop.permute.xlu0 %948
        %952 = vset.pattern.permute.xlu0 0
        %953 = vperm.xlu0 %952, %v935
        %v954 = vpop.permute.xlu0 %953
        %v956 = vmul.f32 %v939, %v901
        %v957 = vmul.f32 %v944, %v911
        %v958 = vmul.f32 %v949, %v921
        %v959 = vmul.f32 %v954, %v931
        %v960 = vld [vmem:[%s4] sm:$0xff]
        %v961 = vld [vmem:[%s4 + $0x8] sm:$0xff]
        %v962 = vld [vmem:[%s4 + $0x10] sm:$0xff]
        %v963 = vld [vmem:[%s4 + $0x18] sm:$0xff]
        %968 = vrot.lane.b32.xlu0 %v956, 126
        %v969 = vpop.permute.xlu0 %968
        %970 = vrot.lane.b32.xlu0 %v957, 126
        %v971 = vpop.permute.xlu0 %970
        %972 = vrot.lane.b32.xlu0 %v958, 126
        %v973 = vpop.permute.xlu0 %972
        %974 = vrot.lane.b32.xlu0 %v959, 126
        %v975 = vpop.permute.xlu0 %974
        %v980 = vmul.f32 %v853, %v969
        %v981 = vmul.f32 %v856, %v971
        %v982 = vmul.f32 %v859, %v973
        %v983 = vmul.f32 %v862, %v975
        %985 = vset.pattern.permute.xlu0 0
        %986 = vperm.xlu0 %985, %v960
        %v987 = vpop.permute.xlu0 %986
        %990 = vset.pattern.permute.xlu0 0
        %991 = vperm.xlu0 %990, %v961
        %v992 = vpop.permute.xlu0 %991
        %995 = vset.pattern.permute.xlu0 0
        %996 = vperm.xlu0 %995, %v962
        %v997 = vpop.permute.xlu0 %996
        %1000 = vset.pattern.permute.xlu0 0
        %1001 = vperm.xlu0 %1000, %v963
        %v1002 = vpop.permute.xlu0 %1001
        %v1004 = vsub.f32 %v987, %v980
        %v1005 = vsub.f32 %v992, %v981
        %v1006 = vsub.f32 %v997, %v982
        %v1007 = vsub.f32 %v1002, %v983
        %1012 = vrot.lane.b32.xlu0 %v1004, 2
        %v1013 = vpop.permute.xlu0 %1012
        %1014 = vrot.lane.b32.xlu0 %v1005, 2
        %v1015 = vpop.permute.xlu0 %1014
        %1016 = vrot.lane.b32.xlu0 %v1006, 2
        %v1017 = vpop.permute.xlu0 %1016
        %1018 = vrot.lane.b32.xlu0 %v1007, 2
        %v1019 = vpop.permute.xlu0 %1018
        %1020 = vrot.lane.b32.xlu0 %v1013, 126
        %v1021 = vpop.permute.xlu0 %1020
        %1022 = vrot.lane.b32.xlu0 %v1015, 126
        %v1023 = vpop.permute.xlu0 %1022
        %1024 = vrot.lane.b32.xlu0 %v1017, 126
        %v1025 = vpop.permute.xlu0 %1024
        %1026 = vrot.lane.b32.xlu0 %v1019, 126
        %v1027 = vpop.permute.xlu0 %1026
        %v1028 = vsel %vm818, %v969, 0
        %v1030 = vsel %vm818, %v971, 0
        %v1032 = vsel %vm818, %v973, 0
        %v1034 = vsel %vm818, %v975, 0
        %v1036 = vsel %vm818, %v1021, 0
        %v1038 = vsel %vm818, %v1023, 0
        %v1040 = vsel %vm818, %v1025, 0
        %v1042 = vsel %vm818, %v1027, 0
        %vm1044 = vcmask 1041408
        %v1046 = vsel %vm1044, %v537, 0
        %1048 = vmatpush.msra.mxu0 0.0
        %1049 = vmatpush.msra.mxu0 0.0
        %1050 = vmatpush.msra.mxu0 0.0
        %1051 = vmatpush.msra.mxu0 0.0
        %1052 = vmatpush.msra.mxu0 0.0
        %1053 = vmatpush.msra.mxu0 0.0
        %1054 = vmatpush.msra.mxu0 0.0
        %1055 = vmatpush.msra.mxu0 0.0
        %1056 = vmatpush.msra.mxu0 0.0
        %1057 = vmatpush.msra.mxu0 0.0
        %1058 = vmatpush.msra.mxu0 0.0
        %1059 = vmatpush.msra.mxu0 0.0
        %1060 = vmatpush.msra.mxu0 0.0
        %1061 = vmatpush.msra.mxu0 0.0
        %1062 = vmatpush.msra.mxu0 0.0
        %1063 = vmatpush.msra.mxu0 %v1046
        %1064 = vmatmul.f32.gmra.mxu0 %v1028
        %v1065 = vpop.f32.mrf.mxu0
        %v1066 = vadd.f32 0.0, %v1065
        %1067 = vmatmul.f32.gmra.mxu0 %v1030
        %v1068 = vpop.f32.mrf.mxu0
        %v1069 = vadd.f32 0.0, %v1068
        %1070 = vmatmul.f32.gmra.mxu0 %v1032
        %v1071 = vpop.f32.mrf.mxu0
        %v1072 = vadd.f32 0.0, %v1071
        %1073 = vmatmul.f32.gmra.mxu0 %v1034
        %v1074 = vpop.f32.mrf.mxu0
        %v1075 = vadd.f32 0.0, %v1074
        %1076 = vmatmul.f32.gmra.mxu0 %v1036
        %v1077 = vpop.f32.mrf.mxu0
        %v1078 = vadd.f32 0.0, %v1077
        %1079 = vmatmul.f32.gmra.mxu0 %v1038
        %v1080 = vpop.f32.mrf.mxu0
        %v1081 = vadd.f32 0.0, %v1080
        %1082 = vmatmul.f32.gmra.mxu0 %v1040
        %v1083 = vpop.f32.mrf.mxu0
        %v1084 = vadd.f32 0.0, %v1083
        %1085 = vmatmul.f32.gmra.mxu0 %v1042
        %v1086 = vpop.f32.mrf.mxu0
        %v1087 = vadd.f32 0.0, %v1086
        %1088 = vdwg.mxu0
        %v1089 = vmul.f32 %v736, %v1066
        %v1090 = vmul.f32 %v737, %v1069
        %v1091 = vmul.f32 %v738, %v1072
        %v1092 = vmul.f32 %v739, %v1075
        %v1093 = vadd.f32 %v1089, %v1078
        %v1094 = vadd.f32 %v1090, %v1081
        %v1095 = vadd.f32 %v1091, %v1084
        %v1096 = vadd.f32 %v1092, %v1087
        %v1097 = vmax.f32 %v1093, 0.0
        %v1098 = vmax.f32 %v1094, 0.0
        %v1099 = vmax.f32 %v1095, 0.0
        %v1100 = vmax.f32 %v1096, 0.0
        %1101 = vrot.lane.b32.xlu0 %v1097, 1
        %v1102 = vpop.permute.xlu0 %1101
        %1103 = vrot.lane.b32.xlu0 %v1098, 1
        %v1104 = vpop.permute.xlu0 %1103
        %1105 = vrot.lane.b32.xlu0 %v1099, 1
        %v1106 = vpop.permute.xlu0 %1105
        %1107 = vrot.lane.b32.xlu0 %v1100, 1
        %v1108 = vpop.permute.xlu0 %1107
        %v1109 = vmul.f32 %v1102, %v549
        %v1110 = vmul.f32 %v1104, %v549
        %v1111 = vmul.f32 %v1106, %v549
        %v1112 = vmul.f32 %v1108, %v549
        %1113 = vrot.lane.b32.xlu0 %v1097, 127
        %v1114 = vpop.permute.xlu0 %1113
        %1115 = vrot.lane.b32.xlu0 %v1098, 127
        %v1116 = vpop.permute.xlu0 %1115
        %1117 = vrot.lane.b32.xlu0 %v1099, 127
        %v1118 = vpop.permute.xlu0 %1117
        %1119 = vrot.lane.b32.xlu0 %v1100, 127
        %v1120 = vpop.permute.xlu0 %1119
        %v1121 = vmul.f32 %v1114, %v564
        %v1122 = vmul.f32 %v1116, %v564
        %v1123 = vmul.f32 %v1118, %v564
        %v1124 = vmul.f32 %v1120, %v564
        %v1125 = vld [vmem:[%s5] sm:$0xff]
        %v1126 = vld [vmem:[%s5 + $0x8] sm:$0xff]
        %v1127 = vld [vmem:[%s5 + $0x10] sm:$0xff]
        %v1128 = vld [vmem:[%s5 + $0x18] sm:$0xff]
        %s1129 = scalar_lea.vmem %s5, 32
        %v1130 = vld [vmem:[%s1129] sm:$0xff]
        %v1131 = vld [vmem:[%s1129 + $0x8] sm:$0xff]
        %v1132 = vld [vmem:[%s1129 + $0x10] sm:$0xff]
        %v1133 = vld [vmem:[%s1129 + $0x18] sm:$0xff]
        %v1135 = vsel %vm579, %v1130, 0
        %v1138 = vsel %vm579, %v1131, 0
        %v1141 = vsel %vm579, %v1132, 0
        %v1144 = vsel %vm579, %v1133, 0
        %1146 = vmatpush.msra.mxu0 0.0
        %1147 = vmatpush.msra.mxu0 0.0
        %1148 = vmatpush.msra.mxu0 0.0
        %1149 = vmatpush.msra.mxu0 0.0
        %1150 = vmatpush.msra.mxu0 0.0
        %1151 = vmatpush.msra.mxu0 0.0
        %1152 = vmatpush.msra.mxu0 0.0
        %1153 = vmatpush.msra.mxu0 0.0
        %1154 = vmatpush.msra.mxu0 0.0
        %1155 = vmatpush.msra.mxu0 0.0
        %1156 = vmatpush.msra.mxu0 0.0
        %1157 = vmatpush.msra.mxu0 0.0
        %1158 = vmatpush.msra.mxu0 %v1100
        %1159 = vmatpush.msra.mxu0 %v1099
        %1160 = vmatpush.msra.mxu0 %v1098
        %1161 = vmatpush.msra.mxu0 %v1097
        %1162 = vmatmul.f32.gmra.mxu0 %v1135
        %v1163 = vpop.f32.mrf.mxu0
        %v1164 = vadd.f32 0.0, %v1163
        %1165 = vmatmul.f32.gmra.mxu0 %v1138
        %v1166 = vpop.f32.mrf.mxu0
        %v1167 = vadd.f32 0.0, %v1166
        %1168 = vmatmul.f32.gmra.mxu0 %v1141
        %v1169 = vpop.f32.mrf.mxu0
        %v1170 = vadd.f32 0.0, %v1169
        %1171 = vmatmul.f32.gmra.mxu0 %v1144
        %v1172 = vpop.f32.mrf.mxu0
        %v1173 = vadd.f32 0.0, %v1172
        %1174 = vdwg.mxu0
        %v1176 = vsel %vm579, %v1125, 0
        %v1179 = vsel %vm579, %v1126, 0
        %v1182 = vsel %vm579, %v1127, 0
        %v1185 = vsel %vm579, %v1128, 0
        %1187 = vmatpush.msra.mxu0 0.0
        %1188 = vmatpush.msra.mxu0 0.0
        %1189 = vmatpush.msra.mxu0 0.0
        %1190 = vmatpush.msra.mxu0 0.0
        %1191 = vmatpush.msra.mxu0 0.0
        %1192 = vmatpush.msra.mxu0 0.0
        %1193 = vmatpush.msra.mxu0 0.0
        %1194 = vmatpush.msra.mxu0 0.0
        %1195 = vmatpush.msra.mxu0 0.0
        %1196 = vmatpush.msra.mxu0 0.0
        %1197 = vmatpush.msra.mxu0 0.0
        %1198 = vmatpush.msra.mxu0 0.0
        %1199 = vmatpush.msra.mxu0 %v1112
        %1200 = vmatpush.msra.mxu0 %v1111
        %1201 = vmatpush.msra.mxu0 %v1110
        %1202 = vmatpush.msra.mxu0 %v1109
        %1203 = vmatmul.f32.gmra.mxu0 %v1176
        %v1204 = vpop.f32.mrf.mxu0
        %v1205 = vadd.f32 %v1164, %v1204
        %1206 = vmatmul.f32.gmra.mxu0 %v1179
        %v1207 = vpop.f32.mrf.mxu0
        %v1208 = vadd.f32 %v1167, %v1207
        %1209 = vmatmul.f32.gmra.mxu0 %v1182
        %v1210 = vpop.f32.mrf.mxu0
        %v1211 = vadd.f32 %v1170, %v1210
        %1212 = vmatmul.f32.gmra.mxu0 %v1185
        %v1213 = vpop.f32.mrf.mxu0
        %v1214 = vadd.f32 %v1173, %v1213
        %1215 = vdwg.mxu0
        %s1216 = scalar_lea.vmem %s5, 64
        %v1217 = vld [vmem:[%s1216] sm:$0xff]
        %v1218 = vld [vmem:[%s1216 + $0x8] sm:$0xff]
        %v1219 = vld [vmem:[%s1216 + $0x10] sm:$0xff]
        %v1220 = vld [vmem:[%s1216 + $0x18] sm:$0xff]
        %v1222 = vsel %vm579, %v1217, 0
        %v1225 = vsel %vm579, %v1218, 0
        %v1228 = vsel %vm579, %v1219, 0
        %v1231 = vsel %vm579, %v1220, 0
        %1233 = vmatpush.msra.mxu0 0.0
        %1234 = vmatpush.msra.mxu0 0.0
        %1235 = vmatpush.msra.mxu0 0.0
        %1236 = vmatpush.msra.mxu0 0.0
        %1237 = vmatpush.msra.mxu0 0.0
        %1238 = vmatpush.msra.mxu0 0.0
        %1239 = vmatpush.msra.mxu0 0.0
        %1240 = vmatpush.msra.mxu0 0.0
        %1241 = vmatpush.msra.mxu0 0.0
        %1242 = vmatpush.msra.mxu0 0.0
        %1243 = vmatpush.msra.mxu0 0.0
        %1244 = vmatpush.msra.mxu0 0.0
        %1245 = vmatpush.msra.mxu0 %v1124
        %1246 = vmatpush.msra.mxu0 %v1123
        %1247 = vmatpush.msra.mxu0 %v1122
        %1248 = vmatpush.msra.mxu0 %v1121
        %1249 = vmatmul.f32.gmra.mxu0 %v1222
        %v1250 = vpop.f32.mrf.mxu0
        %v1251 = vadd.f32 0.0, %v1250
        %1252 = vmatmul.f32.gmra.mxu0 %v1225
        %v1253 = vpop.f32.mrf.mxu0
        %v1254 = vadd.f32 0.0, %v1253
        %1255 = vmatmul.f32.gmra.mxu0 %v1228
        %v1256 = vpop.f32.mrf.mxu0
        %v1257 = vadd.f32 0.0, %v1256
        %1258 = vmatmul.f32.gmra.mxu0 %v1231
        %v1259 = vpop.f32.mrf.mxu0
        %v1260 = vadd.f32 0.0, %v1259
        %1261 = vdwg.mxu0
        %v1262 = vadd.f32 %v1205, %v1251
        %v1263 = vadd.f32 %v1208, %v1254
        %v1264 = vadd.f32 %v1211, %v1257
        %v1265 = vadd.f32 %v1214, %v1260
        %v1266 = vld [vmem:[%s6] sm:$0xff]
        %v1267 = vld [vmem:[%s6 + $0x8] sm:$0xff]
        %v1268 = vld [vmem:[%s6 + $0x10] sm:$0xff]
        %v1269 = vld [vmem:[%s6 + $0x18] sm:$0xff]
        %1271 = vset.pattern.permute.xlu0 0
        %1272 = vperm.xlu0 %1271, %v1266
        %v1273 = vpop.permute.xlu0 %1272
        %1276 = vset.pattern.permute.xlu0 0
        %1277 = vperm.xlu0 %1276, %v1267
        %v1278 = vpop.permute.xlu0 %1277
        %1281 = vset.pattern.permute.xlu0 0
        %1282 = vperm.xlu0 %1281, %v1268
        %v1283 = vpop.permute.xlu0 %1282
        %1286 = vset.pattern.permute.xlu0 0
        %1287 = vperm.xlu0 %1286, %v1269
        %v1288 = vpop.permute.xlu0 %1287
        %v1290 = vadd.f32 %v1262, %v1273
        %v1291 = vadd.f32 %v1263, %v1278
        %v1292 = vadd.f32 %v1264, %v1283
        %v1293 = vadd.f32 %v1265, %v1288
        %1294 = vmatpush.msra.mxu0 %v532
        %1295 = vmatpush.msra.mxu0 %v531
        %1296 = vmatpush.msra.mxu0 %v530
        %1297 = vmatpush.msra.mxu0 %v529
        %1298 = vmatpush.msra.mxu0 %v528
        %1299 = vmatpush.msra.mxu0 %v527
        %1300 = vmatpush.msra.mxu0 %v526
        %1301 = vmatpush.msra.mxu0 %v525
        %1302 = vmatpush.msra.mxu0 %v524
        %1303 = vmatpush.msra.mxu0 %v523
        %1304 = vmatpush.msra.mxu0 %v522
        %1305 = vmatpush.msra.mxu0 %v521
        %1306 = vmatpush.msra.mxu0 %v520
        %1307 = vmatpush.msra.mxu0 %v519
        %1308 = vmatpush.msra.mxu0 %v518
        %1309 = vmatpush.msra.mxu0 %v517
        %1310 = vmatmul.f32.gmra.mxu0 %v1290
        %v1311 = vpop.f32.mrf.mxu0
        %v1312 = vadd.f32 0.0, %v1311
        %1313 = vmatmul.f32.gmra.mxu0 %v1291
        %v1314 = vpop.f32.mrf.mxu0
        %v1315 = vadd.f32 0.0, %v1314
        %1316 = vmatmul.f32.gmra.mxu0 %v1292
        %v1317 = vpop.f32.mrf.mxu0
        %v1318 = vadd.f32 0.0, %v1317
        %1319 = vmatmul.f32.gmra.mxu0 %v1293
        %v1320 = vpop.f32.mrf.mxu0
        %v1321 = vadd.f32 0.0, %v1320
        %1322 = vdwg.mxu0
        %v1323 = vmul.f32 %v1290, %v1290
        %v1324 = vmul.f32 %v1291, %v1291
        %v1325 = vmul.f32 %v1292, %v1292
        %v1326 = vmul.f32 %v1293, %v1293
        %1327 = vmatpush.msra.mxu0 %v532
        %1328 = vmatpush.msra.mxu0 %v531
        %1329 = vmatpush.msra.mxu0 %v530
        %1330 = vmatpush.msra.mxu0 %v529
        %1331 = vmatpush.msra.mxu0 %v528
        %1332 = vmatpush.msra.mxu0 %v527
        %1333 = vmatpush.msra.mxu0 %v526
        %1334 = vmatpush.msra.mxu0 %v525
        %1335 = vmatpush.msra.mxu0 %v524
        %1336 = vmatpush.msra.mxu0 %v523
        %1337 = vmatpush.msra.mxu0 %v522
        %1338 = vmatpush.msra.mxu0 %v521
        %1339 = vmatpush.msra.mxu0 %v520
        %1340 = vmatpush.msra.mxu0 %v519
        %1341 = vmatpush.msra.mxu0 %v518
        %1342 = vmatpush.msra.mxu0 %v517
        %1343 = vmatmul.f32.gmra.mxu0 %v1323
        %v1344 = vpop.f32.mrf.mxu0
        %v1345 = vadd.f32 0.0, %v1344
        %1346 = vmatmul.f32.gmra.mxu0 %v1324
        %v1347 = vpop.f32.mrf.mxu0
        %v1348 = vadd.f32 0.0, %v1347
        %1349 = vmatmul.f32.gmra.mxu0 %v1325
        %v1350 = vpop.f32.mrf.mxu0
        %v1351 = vadd.f32 0.0, %v1350
        %1352 = vmatmul.f32.gmra.mxu0 %v1326
        %v1353 = vpop.f32.mrf.mxu0
        %v1354 = vadd.f32 0.0, %v1353
        %1355 = vdwg.mxu0
        %1360 = vrot.lane.b32.xlu0 %v1345, 2
        %v1361 = vpop.permute.xlu0 %1360
        %1362 = vrot.lane.b32.xlu0 %v1348, 2
        %v1363 = vpop.permute.xlu0 %1362
        %1364 = vrot.lane.b32.xlu0 %v1351, 2
        %v1365 = vpop.permute.xlu0 %1364
        %1366 = vrot.lane.b32.xlu0 %v1354, 2
        %v1367 = vpop.permute.xlu0 %1366
        %v1372 = vsel %vm818, %v1312, %v1361
        %v1373 = vsel %vm818, %v1315, %v1363
        %v1374 = vsel %vm818, %v1318, %v1365
        %v1375 = vsel %vm818, %v1321, %v1367
        %1376 = vmatpush.msra.mxu0 0.0
        %1377 = vmatpush.msra.mxu0 0.0
        %1378 = vmatpush.msra.mxu0 0.0
        %1379 = vmatpush.msra.mxu0 0.0
        %1380 = vmatpush.msra.mxu0 0.0
        %1381 = vmatpush.msra.mxu0 0.0
        %1382 = vmatpush.msra.mxu0 0.0
        %1383 = vmatpush.msra.mxu0 0.0
        %1384 = vmatpush.msra.mxu0 0.0
        %1385 = vmatpush.msra.mxu0 0.0
        %1386 = vmatpush.msra.mxu0 0.0
        %1387 = vmatpush.msra.mxu0 0.0
        %1388 = vmatpush.msra.mxu0 %v1375
        %1389 = vmatpush.msra.mxu0 %v1374
        %1390 = vmatpush.msra.mxu0 %v1373
        %1391 = vmatpush.msra.mxu0 %v1372
        %1392 = vmatmul.f32.gmra.mxu0 %v824
        %v1393 = vpop.f32.mrf.mxu0
        %v1394 = vadd.f32 0.0, %v1393
        %1395 = vmatmul.f32.gmra.mxu0 %v827
        %v1396 = vpop.f32.mrf.mxu0
        %v1397 = vadd.f32 0.0, %v1396
        %1398 = vmatmul.f32.gmra.mxu0 %v830
        %v1399 = vpop.f32.mrf.mxu0
        %v1400 = vadd.f32 0.0, %v1399
        %1401 = vmatmul.f32.gmra.mxu0 %v833
        %v1402 = vpop.f32.mrf.mxu0
        %v1403 = vadd.f32 0.0, %v1402
        %1404 = vdwg.mxu0
        %v1405 = vmul.f32 %v1394, %v1394
        %v1406 = vmul.f32 %v1397, %v1397
        %v1407 = vmul.f32 %v1400, %v1400
        %v1408 = vmul.f32 %v1403, %v1403
        %1413 = vrot.lane.b32.xlu0 %v1405, 2
        %v1414 = vpop.permute.xlu0 %1413
        %1415 = vrot.lane.b32.xlu0 %v1406, 2
        %v1416 = vpop.permute.xlu0 %1415
        %1417 = vrot.lane.b32.xlu0 %v1407, 2
        %v1418 = vpop.permute.xlu0 %1417
        %1419 = vrot.lane.b32.xlu0 %v1408, 2
        %v1420 = vpop.permute.xlu0 %1419
        %v1425 = vsub.f32 %v1394, %v1414
        %v1426 = vsub.f32 %v1397, %v1416
        %v1427 = vsub.f32 %v1400, %v1418
        %v1428 = vsub.f32 %v1403, %v1420
        %v1429 = vadd.f32 %v1425, 1e-05
        %v1430 = vadd.f32 %v1426, 1e-05
        %v1431 = vadd.f32 %v1427, 1e-05
        %v1432 = vadd.f32 %v1428, 1e-05
        %v1433 = vrsqrt.pop %v1429
        %v1434 = vmul.f32 %v1433, %v1429
        %v1435 = vmul.f32 %v1434, %v1433
        %v1436 = vmul.f32 0.5, %v1435
        %v1437 = vsub.f32 1.5, %v1436
        %v1438 = vmul.f32 %v1433, %v1437
        %vm1439 = vweird.f32 %v1429
        %vm1440 = vweird.f32 %v1433
        %vm1441 = vmor %vm1439, %vm1440
        %v1442 = vsel %vm1441, %v1433, %v1438
        %v1443 = vrsqrt.pop %v1430
        %v1444 = vmul.f32 %v1443, %v1430
        %v1445 = vmul.f32 %v1444, %v1443
        %v1446 = vmul.f32 0.5, %v1445
        %v1447 = vsub.f32 1.5, %v1446
        %v1448 = vmul.f32 %v1443, %v1447
        %vm1449 = vweird.f32 %v1430
        %vm1450 = vweird.f32 %v1443
        %vm1451 = vmor %vm1449, %vm1450
        %v1452 = vsel %vm1451, %v1443, %v1448
        %v1453 = vrsqrt.pop %v1431
        %v1454 = vmul.f32 %v1453, %v1431
        %v1455 = vmul.f32 %v1454, %v1453
        %v1456 = vmul.f32 0.5, %v1455
        %v1457 = vsub.f32 1.5, %v1456
        %v1458 = vmul.f32 %v1453, %v1457
        %vm1459 = vweird.f32 %v1431
        %vm1460 = vweird.f32 %v1453
        %vm1461 = vmor %vm1459, %vm1460
        %v1462 = vsel %vm1461, %v1453, %v1458
        %v1463 = vrsqrt.pop %v1432
        %v1464 = vmul.f32 %v1463, %v1432
        %v1465 = vmul.f32 %v1464, %v1463
        %v1466 = vmul.f32 0.5, %v1465
        %v1467 = vsub.f32 1.5, %v1466
        %v1468 = vmul.f32 %v1463, %v1467
        %vm1469 = vweird.f32 %v1432
        %vm1470 = vweird.f32 %v1463
        %vm1471 = vmor %vm1469, %vm1470
        %v1472 = vsel %vm1471, %v1463, %v1468
        %v1473 = vld [vmem:[%s7] sm:$0xff]
        %v1474 = vld [vmem:[%s7 + $0x8] sm:$0xff]
        %v1475 = vld [vmem:[%s7 + $0x10] sm:$0xff]
        %v1476 = vld [vmem:[%s7 + $0x18] sm:$0xff]
        %1478 = vset.pattern.permute.xlu0 0
        %1479 = vperm.xlu0 %1478, %v1473
        %v1480 = vpop.permute.xlu0 %1479
        %1483 = vset.pattern.permute.xlu0 0
        %1484 = vperm.xlu0 %1483, %v1474
        %v1485 = vpop.permute.xlu0 %1484
        %1488 = vset.pattern.permute.xlu0 0
        %1489 = vperm.xlu0 %1488, %v1475
        %v1490 = vpop.permute.xlu0 %1489
        %1493 = vset.pattern.permute.xlu0 0
        %1494 = vperm.xlu0 %1493, %v1476
        %v1495 = vpop.permute.xlu0 %1494
        %v1497 = vmul.f32 %v1480, %v1442
        %v1498 = vmul.f32 %v1485, %v1452
        %v1499 = vmul.f32 %v1490, %v1462
        %v1500 = vmul.f32 %v1495, %v1472
        %v1501 = vld [vmem:[%s8] sm:$0xff]
        %v1502 = vld [vmem:[%s8 + $0x8] sm:$0xff]
        %v1503 = vld [vmem:[%s8 + $0x10] sm:$0xff]
        %v1504 = vld [vmem:[%s8 + $0x18] sm:$0xff]
        %1509 = vrot.lane.b32.xlu0 %v1497, 126
        %v1510 = vpop.permute.xlu0 %1509
        %1511 = vrot.lane.b32.xlu0 %v1498, 126
        %v1512 = vpop.permute.xlu0 %1511
        %1513 = vrot.lane.b32.xlu0 %v1499, 126
        %v1514 = vpop.permute.xlu0 %1513
        %1515 = vrot.lane.b32.xlu0 %v1500, 126
        %v1516 = vpop.permute.xlu0 %1515
        %v1521 = vmul.f32 %v1394, %v1510
        %v1522 = vmul.f32 %v1397, %v1512
        %v1523 = vmul.f32 %v1400, %v1514
        %v1524 = vmul.f32 %v1403, %v1516
        %1526 = vset.pattern.permute.xlu0 0
        %1527 = vperm.xlu0 %1526, %v1501
        %v1528 = vpop.permute.xlu0 %1527
        %1531 = vset.pattern.permute.xlu0 0
        %1532 = vperm.xlu0 %1531, %v1502
        %v1533 = vpop.permute.xlu0 %1532
        %1536 = vset.pattern.permute.xlu0 0
        %1537 = vperm.xlu0 %1536, %v1503
        %v1538 = vpop.permute.xlu0 %1537
        %1541 = vset.pattern.permute.xlu0 0
        %1542 = vperm.xlu0 %1541, %v1504
        %v1543 = vpop.permute.xlu0 %1542
        %v1545 = vsub.f32 %v1528, %v1521
        %v1546 = vsub.f32 %v1533, %v1522
        %v1547 = vsub.f32 %v1538, %v1523
        %v1548 = vsub.f32 %v1543, %v1524
        %1553 = vrot.lane.b32.xlu0 %v1545, 2
        %v1554 = vpop.permute.xlu0 %1553
        %1555 = vrot.lane.b32.xlu0 %v1546, 2
        %v1556 = vpop.permute.xlu0 %1555
        %1557 = vrot.lane.b32.xlu0 %v1547, 2
        %v1558 = vpop.permute.xlu0 %1557
        %1559 = vrot.lane.b32.xlu0 %v1548, 2
        %v1560 = vpop.permute.xlu0 %1559
        %1561 = vrot.lane.b32.xlu0 %v1554, 126
        %v1562 = vpop.permute.xlu0 %1561
        %1563 = vrot.lane.b32.xlu0 %v1556, 126
        %v1564 = vpop.permute.xlu0 %1563
        %1565 = vrot.lane.b32.xlu0 %v1558, 126
        %v1566 = vpop.permute.xlu0 %1565
        %1567 = vrot.lane.b32.xlu0 %v1560, 126
        %v1568 = vpop.permute.xlu0 %1567
        %v1569 = vsel %vm818, %v1510, 0
        %v1571 = vsel %vm818, %v1512, 0
        %v1573 = vsel %vm818, %v1514, 0
        %v1575 = vsel %vm818, %v1516, 0
        %v1577 = vsel %vm818, %v1562, 0
        %v1579 = vsel %vm818, %v1564, 0
        %v1581 = vsel %vm818, %v1566, 0
        %v1583 = vsel %vm818, %v1568, 0
        %1585 = vmatpush.msra.mxu0 0.0
        %1586 = vmatpush.msra.mxu0 0.0
        %1587 = vmatpush.msra.mxu0 0.0
        %1588 = vmatpush.msra.mxu0 0.0
        %1589 = vmatpush.msra.mxu0 0.0
        %1590 = vmatpush.msra.mxu0 0.0
        %1591 = vmatpush.msra.mxu0 0.0
        %1592 = vmatpush.msra.mxu0 0.0
        %1593 = vmatpush.msra.mxu0 0.0
        %1594 = vmatpush.msra.mxu0 0.0
        %1595 = vmatpush.msra.mxu0 0.0
        %1596 = vmatpush.msra.mxu0 0.0
        %1597 = vmatpush.msra.mxu0 0.0
        %1598 = vmatpush.msra.mxu0 0.0
        %1599 = vmatpush.msra.mxu0 0.0
        %1600 = vmatpush.msra.mxu0 %v1046
        %1601 = vmatmul.f32.gmra.mxu0 %v1569
        %v1602 = vpop.f32.mrf.mxu0
        %v1603 = vadd.f32 0.0, %v1602
        %1604 = vmatmul.f32.gmra.mxu0 %v1571
        %v1605 = vpop.f32.mrf.mxu0
        %v1606 = vadd.f32 0.0, %v1605
        %1607 = vmatmul.f32.gmra.mxu0 %v1573
        %v1608 = vpop.f32.mrf.mxu0
        %v1609 = vadd.f32 0.0, %v1608
        %1610 = vmatmul.f32.gmra.mxu0 %v1575
        %v1611 = vpop.f32.mrf.mxu0
        %v1612 = vadd.f32 0.0, %v1611
        %1613 = vmatmul.f32.gmra.mxu0 %v1577
        %v1614 = vpop.f32.mrf.mxu0
        %v1615 = vadd.f32 0.0, %v1614
        %1616 = vmatmul.f32.gmra.mxu0 %v1579
        %v1617 = vpop.f32.mrf.mxu0
        %v1618 = vadd.f32 0.0, %v1617
        %1619 = vmatmul.f32.gmra.mxu0 %v1581
        %v1620 = vpop.f32.mrf.mxu0
        %v1621 = vadd.f32 0.0, %v1620
        %1622 = vmatmul.f32.gmra.mxu0 %v1583
        %v1623 = vpop.f32.mrf.mxu0
        %v1624 = vadd.f32 0.0, %v1623
        %1625 = vdwg.mxu0
        %v1626 = vmul.f32 %v1290, %v1603
        %v1627 = vmul.f32 %v1291, %v1606
        %v1628 = vmul.f32 %v1292, %v1609
        %v1629 = vmul.f32 %v1293, %v1612
        %v1630 = vadd.f32 %v1626, %v1615
        %v1631 = vadd.f32 %v1627, %v1618
        %v1632 = vadd.f32 %v1628, %v1621
        %v1633 = vadd.f32 %v1629, %v1624
        %v1634 = vadd.f32 %v1630, %v513
        %v1635 = vadd.f32 %v1631, %v514
        %v1636 = vadd.f32 %v1632, %v515
        %v1637 = vadd.f32 %v1633, %v516
        %v1638 = vmax.f32 %v1634, 0.0
        %v1639 = vmax.f32 %v1635, 0.0
        %v1640 = vmax.f32 %v1636, 0.0
        %v1641 = vmax.f32 %v1637, 0.0
        %1642 = vst [vmem:[%s512] sm:$0xff] %v1638
        %1643 = vst [vmem:[%s512 + $0x8] sm:$0xff] %v1639
        %1644 = vst [vmem:[%s512 + $0x10] sm:$0xff] %v1640
        %1645 = vst [vmem:[%s512 + $0x18] sm:$0xff] %v1641
        %s1646 = sand.u32 %s335, 1
        %s1647 = scalar_lea.sflag [#allocation4], %s1646
        %s1648 = sand.u32 %s335, 1
        %s1649 = smul.addr %s1648, 32
        %s1650 = scalar_lea.vmem [#allocation3], %s1649
        // Predicated region
        $region115: #{tpu_custom_call.1} parent=109 // pred_check
          %p1651 = pneg %p345
        $region116: #{tpu_custom_call.1} parent=109 // pred_check_branch
          %1653 = sbr.rel (%p1651) target = $region118
        $region117: #{tpu_custom_call.1} parent=109 // pred_region
          %1655 = vsyncadd %s1647, 0
          %s1656 = smul.addr %s28, 8
          %s1657 = scalar_lea.hbm %s14, %s1656
          %s1658 = sshll.u32 %s1650, 4
          %s1659 = int_to_ptr.vmem [resolvable:$true] %s1658
          %s1660 = sshll.u32 %s1657, 4
          %s1661 = int_to_ptr.hbm [resolvable:$true] %s1660
          %1666 = dma.vmem_to_hbm [thread:$0]  %s1659, 512, %s1661, %s1647, 128, 256, 8
        $region118: #{tpu_custom_call.1} parent=109 // pred_fallthru
          _
      $region110: #{tpu_custom_call.1} parent=5 // pred_fallthru
        _
      %p1667 = scmp.le.s32.totalorder 2, %s23
      // Predicated region
      $region119: #{tpu_custom_call.1} parent=5 // pred_check
        %p1668 = pneg %p1667
      $region120: #{tpu_custom_call.1} parent=5 // pred_check_branch
        %1670 = sbr.rel (%p1668) target = $region122
      $region121: #{tpu_custom_call.1} parent=5 // pred_region
        %s1671 = ssub.s32 %s23, 2
        // Predicated region
        $region123: #{tpu_custom_call.1} parent=121 // pred_check
          %p1672 = pneg %p351
        $region124: #{tpu_custom_call.1} parent=121 // pred_check_branch
          %1674 = sbr.rel (%p1672) target = $region126
        $region125: #{tpu_custom_call.1} parent=121 // pred_region
          %s1675 = sand.u32 %s336, 1
          %s1676 = scalar_lea.sflag [#allocation4], %s1675
          %s1677 = sand.u32 %s336, 1
          %s1678 = smul.addr %s1677, 32
          %s1679 = scalar_lea.vmem [#allocation3], %s1678
          %1681 = dma.done %s1676, 512
        $region126: #{tpu_custom_call.1} parent=121 // pred_fallthru
          _
      $region122: #{tpu_custom_call.1} parent=5 // pred_fallthru
        _
    $region6: #{tpu_custom_call.1} parent=1 // loop_footer
      %s27 = sadd.s32 1, %s23
    $region7: #{tpu_custom_call.1} parent=1 // loop_footer_branch
      %22 = sbr.rel target = $region3
    $region8: #{tpu_custom_call.1} parent=1 // loop_exit
      _
    %1682 = vsyncpa [#allocation4], 1
    %s1683 = scalar_lea.sflag [#allocation4], 1
    %1684 = vsyncpa %s1683, 1

</llo_original>
